<compile_context>
chip_gen: v7x
topology: tpu7x:2x2x1
jax: 0.10.0
libtpu: 0.0.40
codegen_flags: <defaults>
</compile_context>

<pallas_src>
import functools

import jax
import jax.numpy as jnp
from jax.experimental import pallas as pl
from jax.experimental.pallas import tpu as pltpu


def _round_up(x, m):
    return ((x + m - 1) // m) * m


def _upstep_kernel(x_ref, xd_ref, w1_ref, b1_ref, w2_ref, b2_ref, o_ref,
                   patch1_ref, patch2_ref, mid_ref, *,
                   H, W, c_half, out_c, cpt1, cpt2, relu):
    """One batch image per grid step, everything in a (C, H*W) layout.

    x_ref, xd_ref : (1, c_half, H*W)   the two tensors to channel-concat
    w1_ref        : (out_c, 9*cpt1)    conv1 weights, k = tap*cpt1 + ci
    w2_ref        : (out_c, 9*cpt2)    conv2 weights, k = tap*cpt2 + ci
    b1_ref, b2_ref: (out_c, 1)
    o_ref         : (1, out_c, H*W)
    patch1_ref    : (9*cpt1, H*W)  VMEM im2col slab for conv1
    patch2_ref    : (9*cpt2, H*W)  VMEM im2col slab for conv2
    mid_ref       : (out_c, H*W)   VMEM conv1 activation (never hits HBM)
    """
    HW = H * W

    # Column index of every flattened spatial position (lane axis).
    w_idx = jax.lax.broadcasted_iota(jnp.int32, (1, HW), 1) % W

    # Zero the im2col slabs every step: the un-written border lanes / padded
    # rows must read as zero, and with a "parallel" batch axis we cannot rely
    # on a one-off program_id==0 init (v7x splits the grid across two cores).
    patch1_ref[...] = jnp.zeros_like(patch1_ref)
    patch2_ref[...] = jnp.zeros_like(patch2_ref)

    def fill_im2col(patch_ref, rows_per_tap, sources):
        """Build the 9-tap im2col slab from flattened (rows, H*W) sources.

        sources: list of (loader(lo, hi) -> (n_rows, hi-lo), row_off, n_rows).
        For tap (dy, dx) the shifted plane equals the source shifted by
        off = (dy-1)*W + (dx-1) on the flat axis; the valid destination range
        is [a, b) below, and the dx != 0 taps additionally need a per-column
        mask (row-boundary wraparound / padding).  Everything else stays zero.
        """
        for t in range(9):
            dyy, dxx = t // 3 - 1, t % 3 - 1
            off = dyy * W + dxx
            a = max(0, -off)               # valid destination flat range [a, b)
            b = HW - max(0, off)
            if dxx == -1:
                col_ok = w_idx[:, a:b] >= 1
            elif dxx == 1:
                col_ok = w_idx[:, a:b] <= W - 2
            else:
                col_ok = None
            for loader, row_off, n_rows in sources:
                seg = loader(a + off, b + off)          # (n_rows, b - a)
                if col_ok is not None:
                    seg = jnp.where(col_ok, seg, 0.0)
                r0 = t * rows_per_tap + row_off
                patch_ref[r0:r0 + n_rows, a:b] = seg

    # ---- conv1: implicit concat([x, x_down]) -> im2col -> one MXU matmul ----
    fill_im2col(
        patch1_ref, cpt1,
        [(lambda lo, hi: x_ref[0, :, lo:hi], 0, c_half),
         (lambda lo, hi: xd_ref[0, :, lo:hi], c_half, c_half)])
    mid = jnp.dot(w1_ref[...], patch1_ref[...],
                  preferred_element_type=jnp.float32)     # (out_c, HW)
    mid = mid + b1_ref[...]                               # + (out_c, 1) bias
    if relu:
        mid = jnp.maximum(mid, 0.0)
    mid_ref[...] = mid                                    # stays in VMEM

    # ---- conv2 on the VMEM-resident intermediate -------------------------
    fill_im2col(
        patch2_ref, cpt2,
        [(lambda lo, hi: mid_ref[:, lo:hi], 0, out_c)])
    out = jnp.dot(w2_ref[...], patch2_ref[...],
                  preferred_element_type=jnp.float32)     # (out_c, HW)
    out = out + b2_ref[...]
    if relu:
        out = jnp.maximum(out, 0.0)
    o_ref[0] = out.astype(o_ref.dtype)                    # lane-dense store


def _to_matmul_weight(w_oihw, rows_per_tap):
    """(O, I, 3, 3) OIHW -> (O, 9*rows_per_tap) with k = (dy*3+dx)*rpt + ci."""
    O, I = w_oihw.shape[0], w_oihw.shape[1]
    w = jnp.transpose(w_oihw, (0, 2, 3, 1))               # (O, 3, 3, I)
    if rows_per_tap != I:                                  # pad ci to sublanes
        w = jnp.pad(w, ((0, 0), (0, 0), (0, 0), (0, rows_per_tap - I)))
    return w.reshape(O, 9 * rows_per_tap)


def upstep_forward(params, x_nchw, x_down_nchw, with_relu=True):
    """Mirrors upStep.forward: cat(channel) -> conv1 -> conv2 (optional ReLUs)."""
    N, c_half, H, W = x_nchw.shape
    assert x_down_nchw.shape == x_nchw.shape
    out_c = params["w1"].shape[0]
    in_c = 2 * c_half
    HW = H * W

    cpt1 = _round_up(in_c, 8)     # im2col rows per tap (sublane aligned)
    cpt2 = _round_up(out_c, 8)

    # Free reshapes only -- no transpose / pad / concat pass over HBM.
    x2 = x_nchw.reshape(N, c_half, HW)
    xd2 = x_down_nchw.reshape(N, c_half, HW)

    # Tiny one-off weight repacking, done in the wrapper (not per grid step).
    w1m = _to_matmul_weight(params["w1"], cpt1)           # (out_c, 9*cpt1)
    w2m = _to_matmul_weight(params["w2"], cpt2)           # (out_c, 9*cpt2)
    b1 = params["b1"].reshape(out_c, 1)
    b2 = params["b2"].reshape(out_c, 1)

    kernel = functools.partial(
        _upstep_kernel, H=H, W=W, c_half=c_half, out_c=out_c,
        cpt1=cpt1, cpt2=cpt2, relu=with_relu)

    out = pl.pallas_call(
        kernel,
        out_shape=jax.ShapeDtypeStruct((N, out_c, HW), x_nchw.dtype),
        grid_spec=pltpu.PrefetchScalarGridSpec(
            num_scalar_prefetch=0,
            grid=(N,),
            in_specs=[
                pl.BlockSpec((1, c_half, HW), lambda n: (n, 0, 0)),
                pl.BlockSpec((1, c_half, HW), lambda n: (n, 0, 0)),
                pl.BlockSpec((out_c, 9 * cpt1), lambda n: (0, 0)),
                pl.BlockSpec((out_c, 1), lambda n: (0, 0)),
                pl.BlockSpec((out_c, 9 * cpt2), lambda n: (0, 0)),
                pl.BlockSpec((out_c, 1), lambda n: (0, 0)),
            ],
            out_specs=pl.BlockSpec((1, out_c, HW), lambda n: (n, 0, 0)),
            scratch_shapes=[
                pltpu.VMEM((9 * cpt1, HW), jnp.float32),   # im2col slab conv1
                pltpu.VMEM((9 * cpt2, HW), jnp.float32),   # im2col slab conv2
                pltpu.VMEM((out_c, HW), jnp.float32),      # conv1 activation
            ],
        ),
        compiler_params=pltpu.CompilerParams(
            dimension_semantics=("parallel",)),
    )(x2, xd2, w1m, b1, w2m, b2)

    return out.reshape(N, out_c, H, W)


def init_upstep_params(key, inC, outC, dtype=jnp.float32):
    """Deterministic Conv2d-style init (uniform +/- 1/sqrt(fan_in)), OIHW."""
    k1, k2, k3, k4 = jax.random.split(key, 4)
    bound1 = (inC * 9) ** -0.5
    bound2 = (outC * 9) ** -0.5
    return {
        "w1": jax.random.uniform(k1, (outC, inC, 3, 3), dtype, -bound1, bound1),
        "b1": jax.random.uniform(k2, (outC,), dtype, -bound1, bound1),
        "w2": jax.random.uniform(k3, (outC, outC, 3, 3), dtype, -bound2, bound2),
        "b2": jax.random.uniform(k4, (outC,), dtype, -bound2, bound2),
    }


def _reference_forward(params, x, x_down, with_relu=True):
    """Pure-JAX reference using lax.conv_general_dilated (NCHW / OIHW)."""
    h = jnp.concatenate([x, x_down], axis=1)

    def conv(h, w, b):
        y = jax.lax.conv_general_dilated(
            h, w, window_strides=(1, 1), padding=((1, 1), (1, 1)),
            dimension_numbers=("NCHW", "OIHW", "NCHW"))
        return y + b[None, :, None, None]

    h = conv(h, params["w1"], params["b1"])
    if with_relu:
        h = jnp.maximum(h, 0.0)
    h = conv(h, params["w2"], params["b2"])
    if with_relu:
        h = jnp.maximum(h, 0.0)
    return h


if __name__ == "__main__":
    # x and x_down each (2, 4, 16, 16) NCHW -> inC = 8, outC = 4.
    N, c_half, H, W = 2, 4, 16, 16
    in_c, out_c = 2 * c_half, 4

    key = jax.random.PRNGKey(0)
    kx, kxd, kp = jax.random.split(key, 3)
    x = jax.random.normal(kx, (N, c_half, H, W), jnp.float32)
    x_down = jax.random.normal(kxd, (N, c_half, H, W), jnp.float32)
    params = init_upstep_params(kp, in_c, out_c)

    out = jax.block_until_ready(upstep_forward(params, x, x_down, True))
    assert out.shape == (N, out_c, H, W), out.shape

    ref = jax.block_until_ready(_reference_forward(params, x, x_down, True))
    max_err = float(jnp.max(jnp.abs(out - ref)))
    # 1e-3 tolerance: the MXU matmul and XLA's conv may use different f32
    # multi-pass groupings; a real indexing/mask bug would be O(0.1 .. 1).
    assert jnp.allclose(out, ref, rtol=1e-3, atol=1e-3), max_err

    print("KERNEL_OK")
</pallas_src>

<mosaic_0001>
module attributes {stable_mosaic.version = 11 : i64} {
  func.func @_upstep_kernel(%arg0: i32, %arg1: memref<1x4x256xf32, #tpu.memory_space<vmem>>, %arg2: memref<1x4x256xf32, #tpu.memory_space<vmem>>, %arg3: memref<4x72xf32, #tpu.memory_space<vmem>>, %arg4: memref<4x1xf32, #tpu.memory_space<vmem>>, %arg5: memref<4x72xf32, #tpu.memory_space<vmem>>, %arg6: memref<4x1xf32, #tpu.memory_space<vmem>>, %arg7: memref<1x4x256xf32, #tpu.memory_space<vmem>>, %arg8: memref<72x256xf32, #tpu.memory_space<vmem>>, %arg9: memref<72x256xf32, #tpu.memory_space<vmem>>, %arg10: memref<4x256xf32, #tpu.memory_space<vmem>>) attributes {dimension_semantics = [#tpu.dimension_semantics<parallel>], iteration_bounds = array<i64: 2>, scalar_prefetch = 0 : i64, scratch_operands = 3 : i64, tpu.core_type = #tpu.core_type<tc>, window_params = [{transform_indices = @transform_0, window_bounds = array<i64: 1, 4, 256>}, {transform_indices = @transform_1, window_bounds = array<i64: 1, 4, 256>}, {pipeline_mode = #tpu.pipeline_mode<synchronous>, transform_indices = @transform_2, window_bounds = array<i64: 4, 72>}, {pipeline_mode = #tpu.pipeline_mode<synchronous>, transform_indices = @transform_3, window_bounds = array<i64: 4, 1>}, {pipeline_mode = #tpu.pipeline_mode<synchronous>, transform_indices = @transform_4, window_bounds = array<i64: 4, 72>}, {pipeline_mode = #tpu.pipeline_mode<synchronous>, transform_indices = @transform_5, window_bounds = array<i64: 4, 1>}, {transform_indices = @transform_6, window_bounds = array<i64: 1, 4, 256>}]} {
    %0 = tpu.iota {dimensions = array<i32: 1>} : vector<1x256xi32>
    %c16_i32 = arith.constant 16 : i32
    %c0_i32 = arith.constant 0 : i32
    %1 = arith.cmpi eq, %c16_i32, %c0_i32 : i32
    %c1_i32 = arith.constant 1 : i32
    %2 = arith.select %1, %c1_i32, %c16_i32 : i32
    %3 = vector.broadcast %2 : i32 to vector<1x256xi32>
    %4 = arith.remsi %0, %3 : vector<1x256xi32>
    %c0_i32_0 = arith.constant 0 : i32
    %5 = vector.broadcast %c0_i32_0 : i32 to vector<1x256xi32>
    %6 = arith.cmpi ne, %4, %5 : vector<1x256xi32>
    %c0_i32_1 = arith.constant 0 : i32
    %7 = vector.broadcast %c0_i32_1 : i32 to vector<1x256xi32>
    %8 = arith.cmpi slt, %4, %7 : vector<1x256xi32>
    %c0_i32_2 = arith.constant 0 : i32
    %9 = arith.cmpi slt, %2, %c0_i32_2 : i32
    %10 = vector.broadcast %9 : i1 to vector<1x256xi1>
    %11 = vector.broadcast %10 : vector<1x256xi1> to vector<1x256xi1>
    %12 = arith.xori %8, %11 : vector<1x256xi1>
    %13 = arith.andi %12, %6 : vector<1x256xi1>
    %14 = vector.broadcast %2 : i32 to vector<1x256xi32>
    %15 = arith.addi %4, %14 : vector<1x256xi32>
    %16 = arith.select %13, %15, %4 : vector<1x256xi1>, vector<1x256xi32>
    %cst = arith.constant 0.000000e+00 : f32
    %17 = vector.broadcast %cst : f32 to vector<72x256xf32>
    %c0 = arith.constant 0 : index
    %c0_3 = arith.constant 0 : index
    %18 = vector.load %arg8[%c0, %c0_3] : memref<72x256xf32, #tpu.memory_space<vmem>>, vector<72x256xf32>
    tpu.vector_store %arg8[%c0, %c0_3], %17 {strides = array<i32>} : memref<72x256xf32, #tpu.memory_space<vmem>>, vector<72x256xf32>,
    %cst_4 = arith.constant 0.000000e+00 : f32
    %19 = vector.broadcast %cst_4 : f32 to vector<72x256xf32>
    %c0_5 = arith.constant 0 : index
    %c0_6 = arith.constant 0 : index
    %20 = vector.load %arg9[%c0_5, %c0_6] : memref<72x256xf32, #tpu.memory_space<vmem>>, vector<72x256xf32>
    tpu.vector_store %arg9[%c0_5, %c0_6], %19 {strides = array<i32>} : memref<72x256xf32, #tpu.memory_space<vmem>>, vector<72x256xf32>,
    %21 = vector.extract_strided_slice %16 {offsets = [0, 17], sizes = [1, 239], strides = [1, 1]} : vector<1x256xi32> to vector<1x239xi32>
    %c1_i32_7 = arith.constant 1 : i32
    %22 = vector.broadcast %c1_i32_7 : i32 to vector<1x239xi32>
    %23 = arith.cmpi sge, %21, %22 : vector<1x239xi32>
    %c0_8 = arith.constant 0 : index
    %c0_9 = arith.constant 0 : index
    %c0_10 = arith.constant 0 : index
    %24 = vector.load %arg1[%c0_8, %c0_9, %c0_10] : memref<1x4x256xf32, #tpu.memory_space<vmem>>, vector<1x4x239xf32>
    %25 = vector.shape_cast %24 : vector<1x4x239xf32> to vector<4x239xf32>
    %cst_11 = arith.constant 0.000000e+00 : f32
    %26 = vector.shape_cast %23 : vector<1x239xi1> to vector<1x239xi1>
    %27 = vector.broadcast %26 : vector<1x239xi1> to vector<4x239xi1>
    %28 = vector.broadcast %cst_11 : f32 to vector<4x239xf32>
    %29 = arith.select %27, %25, %28 : vector<4x239xi1>, vector<4x239xf32>
    %c0_12 = arith.constant 0 : index
    %c17 = arith.constant 17 : index
    %30 = vector.load %arg8[%c0_12, %c17] : memref<72x256xf32, #tpu.memory_space<vmem>>, vector<4x239xf32>
    tpu.vector_store %arg8[%c0_12, %c17], %29 {strides = array<i32>} : memref<72x256xf32, #tpu.memory_space<vmem>>, vector<4x239xf32>,
    %c0_13 = arith.constant 0 : index
    %c0_14 = arith.constant 0 : index
    %c0_15 = arith.constant 0 : index
    %31 = vector.load %arg2[%c0_13, %c0_14, %c0_15] : memref<1x4x256xf32, #tpu.memory_space<vmem>>, vector<1x4x239xf32>
    %32 = vector.shape_cast %31 : vector<1x4x239xf32> to vector<4x239xf32>
    %cst_16 = arith.constant 0.000000e+00 : f32
    %33 = vector.shape_cast %23 : vector<1x239xi1> to vector<1x239xi1>
    %34 = vector.broadcast %33 : vector<1x239xi1> to vector<4x239xi1>
    %35 = vector.broadcast %cst_16 : f32 to vector<4x239xf32>
    %36 = arith.select %34, %32, %35 : vector<4x239xi1>, vector<4x239xf32>
    %c4 = arith.constant 4 : index
    %c17_17 = arith.constant 17 : index
    %37 = vector.load %arg8[%c4, %c17_17] : memref<72x256xf32, #tpu.memory_space<vmem>>, vector<4x239xf32>
    tpu.vector_store %arg8[%c4, %c17_17], %36 {strides = array<i32>} : memref<72x256xf32, #tpu.memory_space<vmem>>, vector<4x239xf32>,
    %c0_18 = arith.constant 0 : index
    %c0_19 = arith.constant 0 : index
    %c0_20 = arith.constant 0 : index
    %38 = vector.load %arg1[%c0_18, %c0_19, %c0_20] : memref<1x4x256xf32, #tpu.memory_space<vmem>>, vector<1x4x240xf32>
    %39 = vector.shape_cast %38 : vector<1x4x240xf32> to vector<4x240xf32>
    %c8 = arith.constant 8 : index
    %c16 = arith.constant 16 : index
    %40 = vector.load %arg8[%c8, %c16] : memref<72x256xf32, #tpu.memory_space<vmem>>, vector<4x240xf32>
    tpu.vector_store %arg8[%c8, %c16], %39 {strides = array<i32>} : memref<72x256xf32, #tpu.memory_space<vmem>>, vector<4x240xf32>,
    %c0_21 = arith.constant 0 : index
    %c0_22 = arith.constant 0 : index
    %c0_23 = arith.constant 0 : index
    %41 = vector.load %arg2[%c0_21, %c0_22, %c0_23] : memref<1x4x256xf32, #tpu.memory_space<vmem>>, vector<1x4x240xf32>
    %42 = vector.shape_cast %41 : vector<1x4x240xf32> to vector<4x240xf32>
    %c12 = arith.constant 12 : index
    %c16_24 = arith.constant 16 : index
    %43 = vector.load %arg8[%c12, %c16_24] : memref<72x256xf32, #tpu.memory_space<vmem>>, vector<4x240xf32>
    tpu.vector_store %arg8[%c12, %c16_24], %42 {strides = array<i32>} : memref<72x256xf32, #tpu.memory_space<vmem>>, vector<4x240xf32>,
    %44 = vector.extract_strided_slice %16 {offsets = [0, 15], sizes = [1, 241], strides = [1, 1]} : vector<1x256xi32> to vector<1x241xi32>
    %c14_i32 = arith.constant 14 : i32
    %45 = vector.broadcast %c14_i32 : i32 to vector<1x241xi32>
    %46 = arith.cmpi sle, %44, %45 : vector<1x241xi32>
    %c0_25 = arith.constant 0 : index
    %c0_26 = arith.constant 0 : index
    %c0_27 = arith.constant 0 : index
    %47 = vector.load %arg1[%c0_25, %c0_26, %c0_27] : memref<1x4x256xf32, #tpu.memory_space<vmem>>, vector<1x4x241xf32>
    %48 = vector.shape_cast %47 : vector<1x4x241xf32> to vector<4x241xf32>
    %cst_28 = arith.constant 0.000000e+00 : f32
    %49 = vector.shape_cast %46 : vector<1x241xi1> to vector<1x241xi1>
    %50 = vector.broadcast %49 : vector<1x241xi1> to vector<4x241xi1>
    %51 = vector.broadcast %cst_28 : f32 to vector<4x241xf32>
    %52 = arith.select %50, %48, %51 : vector<4x241xi1>, vector<4x241xf32>
    %c16_29 = arith.constant 16 : index
    %c15 = arith.constant 15 : index
    %53 = vector.load %arg8[%c16_29, %c15] : memref<72x256xf32, #tpu.memory_space<vmem>>, vector<4x241xf32>
    tpu.vector_store %arg8[%c16_29, %c15], %52 {strides = array<i32>} : memref<72x256xf32, #tpu.memory_space<vmem>>, vector<4x241xf32>,
    %c0_30 = arith.constant 0 : index
    %c0_31 = arith.constant 0 : index
    %c0_32 = arith.constant 0 : index
    %54 = vector.load %arg2[%c0_30, %c0_31, %c0_32] : memref<1x4x256xf32, #tpu.memory_space<vmem>>, vector<1x4x241xf32>
    %55 = vector.shape_cast %54 : vector<1x4x241xf32> to vector<4x241xf32>
    %cst_33 = arith.constant 0.000000e+00 : f32
    %56 = vector.shape_cast %46 : vector<1x241xi1> to vector<1x241xi1>
    %57 = vector.broadcast %56 : vector<1x241xi1> to vector<4x241xi1>
    %58 = vector.broadcast %cst_33 : f32 to vector<4x241xf32>
    %59 = arith.select %57, %55, %58 : vector<4x241xi1>, vector<4x241xf32>
    %c20 = arith.constant 20 : index
    %c15_34 = arith.constant 15 : index
    %60 = vector.load %arg8[%c20, %c15_34] : memref<72x256xf32, #tpu.memory_space<vmem>>, vector<4x241xf32>
    tpu.vector_store %arg8[%c20, %c15_34], %59 {strides = array<i32>} : memref<72x256xf32, #tpu.memory_space<vmem>>, vector<4x241xf32>,
    %61 = vector.extract_strided_slice %16 {offsets = [0, 1], sizes = [1, 255], strides = [1, 1]} : vector<1x256xi32> to vector<1x255xi32>
    %c1_i32_35 = arith.constant 1 : i32
    %62 = vector.broadcast %c1_i32_35 : i32 to vector<1x255xi32>
    %63 = arith.cmpi sge, %61, %62 : vector<1x255xi32>
    %c0_36 = arith.constant 0 : index
    %c0_37 = arith.constant 0 : index
    %c0_38 = arith.constant 0 : index
    %64 = vector.load %arg1[%c0_36, %c0_37, %c0_38] : memref<1x4x256xf32, #tpu.memory_space<vmem>>, vector<1x4x255xf32>
    %65 = vector.shape_cast %64 : vector<1x4x255xf32> to vector<4x255xf32>
    %cst_39 = arith.constant 0.000000e+00 : f32
    %66 = vector.shape_cast %63 : vector<1x255xi1> to vector<1x255xi1>
    %67 = vector.broadcast %66 : vector<1x255xi1> to vector<4x255xi1>
    %68 = vector.broadcast %cst_39 : f32 to vector<4x255xf32>
    %69 = arith.select %67, %65, %68 : vector<4x255xi1>, vector<4x255xf32>
    %c24 = arith.constant 24 : index
    %c1 = arith.constant 1 : index
    %70 = vector.load %arg8[%c24, %c1] : memref<72x256xf32, #tpu.memory_space<vmem>>, vector<4x255xf32>
    tpu.vector_store %arg8[%c24, %c1], %69 {strides = array<i32>} : memref<72x256xf32, #tpu.memory_space<vmem>>, vector<4x255xf32>,
    %c0_40 = arith.constant 0 : index
    %c0_41 = arith.constant 0 : index
    %c0_42 = arith.constant 0 : index
    %71 = vector.load %arg2[%c0_40, %c0_41, %c0_42] : memref<1x4x256xf32, #tpu.memory_space<vmem>>, vector<1x4x255xf32>
    %72 = vector.shape_cast %71 : vector<1x4x255xf32> to vector<4x255xf32>
    %cst_43 = arith.constant 0.000000e+00 : f32
    %73 = vector.shape_cast %63 : vector<1x255xi1> to vector<1x255xi1>
    %74 = vector.broadcast %73 : vector<1x255xi1> to vector<4x255xi1>
    %75 = vector.broadcast %cst_43 : f32 to vector<4x255xf32>
    %76 = arith.select %74, %72, %75 : vector<4x255xi1>, vector<4x255xf32>
    %c28 = arith.constant 28 : index
    %c1_44 = arith.constant 1 : index
    %77 = vector.load %arg8[%c28, %c1_44] : memref<72x256xf32, #tpu.memory_space<vmem>>, vector<4x255xf32>
    tpu.vector_store %arg8[%c28, %c1_44], %76 {strides = array<i32>} : memref<72x256xf32, #tpu.memory_space<vmem>>, vector<4x255xf32>,
    %c0_45 = arith.constant 0 : index
    %c0_46 = arith.constant 0 : index
    %c0_47 = arith.constant 0 : index
    %78 = vector.load %arg1[%c0_45, %c0_46, %c0_47] : memref<1x4x256xf32, #tpu.memory_space<vmem>>, vector<1x4x256xf32>
    %79 = vector.shape_cast %78 : vector<1x4x256xf32> to vector<4x256xf32>
    %c32 = arith.constant 32 : index
    %c0_48 = arith.constant 0 : index
    %80 = vector.load %arg8[%c32, %c0_48] : memref<72x256xf32, #tpu.memory_space<vmem>>, vector<4x256xf32>
    tpu.vector_store %arg8[%c32, %c0_48], %79 {strides = array<i32>} : memref<72x256xf32, #tpu.memory_space<vmem>>, vector<4x256xf32>,
    %c0_49 = arith.constant 0 : index
    %c0_50 = arith.constant 0 : index
    %c0_51 = arith.constant 0 : index
    %81 = vector.load %arg2[%c0_49, %c0_50, %c0_51] : memref<1x4x256xf32, #tpu.memory_space<vmem>>, vector<1x4x256xf32>
    %82 = vector.shape_cast %81 : vector<1x4x256xf32> to vector<4x256xf32>
    %c36 = arith.constant 36 : index
    %c0_52 = arith.constant 0 : index
    %83 = vector.load %arg8[%c36, %c0_52] : memref<72x256xf32, #tpu.memory_space<vmem>>, vector<4x256xf32>
    tpu.vector_store %arg8[%c36, %c0_52], %82 {strides = array<i32>} : memref<72x256xf32, #tpu.memory_space<vmem>>, vector<4x256xf32>,
    %84 = vector.extract_strided_slice %16 {offsets = [0, 0], sizes = [1, 255], strides = [1, 1]} : vector<1x256xi32> to vector<1x255xi32>
    %c14_i32_53 = arith.constant 14 : i32
    %85 = vector.broadcast %c14_i32_53 : i32 to vector<1x255xi32>
    %86 = arith.cmpi sle, %84, %85 : vector<1x255xi32>
    %c0_54 = arith.constant 0 : index
    %c0_55 = arith.constant 0 : index
    %c1_56 = arith.constant 1 : index
    %87 = vector.load %arg1[%c0_54, %c0_55, %c1_56] : memref<1x4x256xf32, #tpu.memory_space<vmem>>, vector<1x4x255xf32>
    %88 = vector.shape_cast %87 : vector<1x4x255xf32> to vector<4x255xf32>
    %cst_57 = arith.constant 0.000000e+00 : f32
    %89 = vector.shape_cast %86 : vector<1x255xi1> to vector<1x255xi1>
    %90 = vector.broadcast %89 : vector<1x255xi1> to vector<4x255xi1>
    %91 = vector.broadcast %cst_57 : f32 to vector<4x255xf32>
    %92 = arith.select %90, %88, %91 : vector<4x255xi1>, vector<4x255xf32>
    %c40 = arith.constant 40 : index
    %c0_58 = arith.constant 0 : index
    %93 = vector.load %arg8[%c40, %c0_58] : memref<72x256xf32, #tpu.memory_space<vmem>>, vector<4x255xf32>
    tpu.vector_store %arg8[%c40, %c0_58], %92 {strides = array<i32>} : memref<72x256xf32, #tpu.memory_space<vmem>>, vector<4x255xf32>,
    %c0_59 = arith.constant 0 : index
    %c0_60 = arith.constant 0 : index
    %c1_61 = arith.constant 1 : index
    %94 = vector.load %arg2[%c0_59, %c0_60, %c1_61] : memref<1x4x256xf32, #tpu.memory_space<vmem>>, vector<1x4x255xf32>
    %95 = vector.shape_cast %94 : vector<1x4x255xf32> to vector<4x255xf32>
    %cst_62 = arith.constant 0.000000e+00 : f32
    %96 = vector.shape_cast %86 : vector<1x255xi1> to vector<1x255xi1>
    %97 = vector.broadcast %96 : vector<1x255xi1> to vector<4x255xi1>
    %98 = vector.broadcast %cst_62 : f32 to vector<4x255xf32>
    %99 = arith.select %97, %95, %98 : vector<4x255xi1>, vector<4x255xf32>
    %c44 = arith.constant 44 : index
    %c0_63 = arith.constant 0 : index
    %100 = vector.load %arg8[%c44, %c0_63] : memref<72x256xf32, #tpu.memory_space<vmem>>, vector<4x255xf32>
    tpu.vector_store %arg8[%c44, %c0_63], %99 {strides = array<i32>} : memref<72x256xf32, #tpu.memory_space<vmem>>, vector<4x255xf32>,
    %101 = vector.extract_strided_slice %16 {offsets = [0, 0], sizes = [1, 241], strides = [1, 1]} : vector<1x256xi32> to vector<1x241xi32>
    %c1_i32_64 = arith.constant 1 : i32
    %102 = vector.broadcast %c1_i32_64 : i32 to vector<1x241xi32>
    %103 = arith.cmpi sge, %101, %102 : vector<1x241xi32>
    %c0_65 = arith.constant 0 : index
    %c0_66 = arith.constant 0 : index
    %c15_67 = arith.constant 15 : index
    %104 = vector.load %arg1[%c0_65, %c0_66, %c15_67] : memref<1x4x256xf32, #tpu.memory_space<vmem>>, vector<1x4x241xf32>
    %105 = vector.shape_cast %104 : vector<1x4x241xf32> to vector<4x241xf32>
    %cst_68 = arith.constant 0.000000e+00 : f32
    %106 = vector.shape_cast %103 : vector<1x241xi1> to vector<1x241xi1>
    %107 = vector.broadcast %106 : vector<1x241xi1> to vector<4x241xi1>
    %108 = vector.broadcast %cst_68 : f32 to vector<4x241xf32>
    %109 = arith.select %107, %105, %108 : vector<4x241xi1>, vector<4x241xf32>
    %c48 = arith.constant 48 : index
    %c0_69 = arith.constant 0 : index
    %110 = vector.load %arg8[%c48, %c0_69] : memref<72x256xf32, #tpu.memory_space<vmem>>, vector<4x241xf32>
    tpu.vector_store %arg8[%c48, %c0_69], %109 {strides = array<i32>} : memref<72x256xf32, #tpu.memory_space<vmem>>, vector<4x241xf32>,
    %c0_70 = arith.constant 0 : index
    %c0_71 = arith.constant 0 : index
    %c15_72 = arith.constant 15 : index
    %111 = vector.load %arg2[%c0_70, %c0_71, %c15_72] : memref<1x4x256xf32, #tpu.memory_space<vmem>>, vector<1x4x241xf32>
    %112 = vector.shape_cast %111 : vector<1x4x241xf32> to vector<4x241xf32>
    %cst_73 = arith.constant 0.000000e+00 : f32
    %113 = vector.shape_cast %103 : vector<1x241xi1> to vector<1x241xi1>
    %114 = vector.broadcast %113 : vector<1x241xi1> to vector<4x241xi1>
    %115 = vector.broadcast %cst_73 : f32 to vector<4x241xf32>
    %116 = arith.select %114, %112, %115 : vector<4x241xi1>, vector<4x241xf32>
    %c52 = arith.constant 52 : index
    %c0_74 = arith.constant 0 : index
    %117 = vector.load %arg8[%c52, %c0_74] : memref<72x256xf32, #tpu.memory_space<vmem>>, vector<4x241xf32>
    tpu.vector_store %arg8[%c52, %c0_74], %116 {strides = array<i32>} : memref<72x256xf32, #tpu.memory_space<vmem>>, vector<4x241xf32>,
    %c0_75 = arith.constant 0 : index
    %c0_76 = arith.constant 0 : index
    %c16_77 = arith.constant 16 : index
    %118 = vector.load %arg1[%c0_75, %c0_76, %c16_77] : memref<1x4x256xf32, #tpu.memory_space<vmem>>, vector<1x4x240xf32>
    %119 = vector.shape_cast %118 : vector<1x4x240xf32> to vector<4x240xf32>
    %c56 = arith.constant 56 : index
    %c0_78 = arith.constant 0 : index
    %120 = vector.load %arg8[%c56, %c0_78] : memref<72x256xf32, #tpu.memory_space<vmem>>, vector<4x240xf32>
    tpu.vector_store %arg8[%c56, %c0_78], %119 {strides = array<i32>} : memref<72x256xf32, #tpu.memory_space<vmem>>, vector<4x240xf32>,
    %c0_79 = arith.constant 0 : index
    %c0_80 = arith.constant 0 : index
    %c16_81 = arith.constant 16 : index
    %121 = vector.load %arg2[%c0_79, %c0_80, %c16_81] : memref<1x4x256xf32, #tpu.memory_space<vmem>>, vector<1x4x240xf32>
    %122 = vector.shape_cast %121 : vector<1x4x240xf32> to vector<4x240xf32>
    %c60 = arith.constant 60 : index
    %c0_82 = arith.constant 0 : index
    %123 = vector.load %arg8[%c60, %c0_82] : memref<72x256xf32, #tpu.memory_space<vmem>>, vector<4x240xf32>
    tpu.vector_store %arg8[%c60, %c0_82], %122 {strides = array<i32>} : memref<72x256xf32, #tpu.memory_space<vmem>>, vector<4x240xf32>,
    %124 = vector.extract_strided_slice %16 {offsets = [0, 0], sizes = [1, 239], strides = [1, 1]} : vector<1x256xi32> to vector<1x239xi32>
    %c14_i32_83 = arith.constant 14 : i32
    %125 = vector.broadcast %c14_i32_83 : i32 to vector<1x239xi32>
    %126 = arith.cmpi sle, %124, %125 : vector<1x239xi32>
    %c0_84 = arith.constant 0 : index
    %c0_85 = arith.constant 0 : index
    %c17_86 = arith.constant 17 : index
    %127 = vector.load %arg1[%c0_84, %c0_85, %c17_86] : memref<1x4x256xf32, #tpu.memory_space<vmem>>, vector<1x4x239xf32>
    %128 = vector.shape_cast %127 : vector<1x4x239xf32> to vector<4x239xf32>
    %cst_87 = arith.constant 0.000000e+00 : f32
    %129 = vector.shape_cast %126 : vector<1x239xi1> to vector<1x239xi1>
    %130 = vector.broadcast %129 : vector<1x239xi1> to vector<4x239xi1>
    %131 = vector.broadcast %cst_87 : f32 to vector<4x239xf32>
    %132 = arith.select %130, %128, %131 : vector<4x239xi1>, vector<4x239xf32>
    %c64 = arith.constant 64 : index
    %c0_88 = arith.constant 0 : index
    %133 = vector.load %arg8[%c64, %c0_88] : memref<72x256xf32, #tpu.memory_space<vmem>>, vector<4x239xf32>
    tpu.vector_store %arg8[%c64, %c0_88], %132 {strides = array<i32>} : memref<72x256xf32, #tpu.memory_space<vmem>>, vector<4x239xf32>,
    %c0_89 = arith.constant 0 : index
    %c0_90 = arith.constant 0 : index
    %c17_91 = arith.constant 17 : index
    %134 = vector.load %arg2[%c0_89, %c0_90, %c17_91] : memref<1x4x256xf32, #tpu.memory_space<vmem>>, vector<1x4x239xf32>
    %135 = vector.shape_cast %134 : vector<1x4x239xf32> to vector<4x239xf32>
    %cst_92 = arith.constant 0.000000e+00 : f32
    %136 = vector.shape_cast %126 : vector<1x239xi1> to vector<1x239xi1>
    %137 = vector.broadcast %136 : vector<1x239xi1> to vector<4x239xi1>
    %138 = vector.broadcast %cst_92 : f32 to vector<4x239xf32>
    %139 = arith.select %137, %135, %138 : vector<4x239xi1>, vector<4x239xf32>
    %c68 = arith.constant 68 : index
    %c0_93 = arith.constant 0 : index
    %140 = vector.load %arg8[%c68, %c0_93] : memref<72x256xf32, #tpu.memory_space<vmem>>, vector<4x239xf32>
    tpu.vector_store %arg8[%c68, %c0_93], %139 {strides = array<i32>} : memref<72x256xf32, #tpu.memory_space<vmem>>, vector<4x239xf32>,
    %c0_94 = arith.constant 0 : index
    %c0_95 = arith.constant 0 : index
    %141 = vector.load %arg3[%c0_94, %c0_95] : memref<4x72xf32, #tpu.memory_space<vmem>>, vector<4x72xf32>
    %c0_96 = arith.constant 0 : index
    %c0_97 = arith.constant 0 : index
    %142 = vector.load %arg8[%c0_96, %c0_97] : memref<72x256xf32, #tpu.memory_space<vmem>>, vector<72x256xf32>
    %cst_98 = arith.constant dense<0.000000e+00> : vector<4x256xf32>
    %143 = tpu.matmul %141, %142, %cst_98 {dimension_numbers = #tpu.dot_dimension_numbers<[1], [0], [0], [1], [0, 0, 1, 1], [], []>} : vector<4x72xf32>, vector<72x256xf32>, vector<4x256xf32> -> vector<4x256xf32>
    %c0_99 = arith.constant 0 : index
    %c0_100 = arith.constant 0 : index
    %144 = vector.load %arg4[%c0_99, %c0_100] : memref<4x1xf32, #tpu.memory_space<vmem>>, vector<4x1xf32>
    %145 = vector.broadcast %144 : vector<4x1xf32> to vector<4x256xf32>
    %146 = arith.addf %143, %145 : vector<4x256xf32>
    %cst_101 = arith.constant 0.000000e+00 : f32
    %147 = vector.broadcast %cst_101 : f32 to vector<4x256xf32>
    %148 = arith.maximumf %146, %147 : vector<4x256xf32>
    %c0_102 = arith.constant 0 : index
    %c0_103 = arith.constant 0 : index
    %149 = vector.load %arg10[%c0_102, %c0_103] : memref<4x256xf32, #tpu.memory_space<vmem>>, vector<4x256xf32>
    tpu.vector_store %arg10[%c0_102, %c0_103], %148 {strides = array<i32>} : memref<4x256xf32, #tpu.memory_space<vmem>>, vector<4x256xf32>,
    %150 = vector.extract_strided_slice %16 {offsets = [0, 17], sizes = [1, 239], strides = [1, 1]} : vector<1x256xi32> to vector<1x239xi32>
    %c1_i32_104 = arith.constant 1 : i32
    %151 = vector.broadcast %c1_i32_104 : i32 to vector<1x239xi32>
    %152 = arith.cmpi sge, %150, %151 : vector<1x239xi32>
    %c0_105 = arith.constant 0 : index
    %c0_106 = arith.constant 0 : index
    %153 = vector.load %arg10[%c0_105, %c0_106] : memref<4x256xf32, #tpu.memory_space<vmem>>, vector<4x239xf32>
    %cst_107 = arith.constant 0.000000e+00 : f32
    %154 = vector.shape_cast %152 : vector<1x239xi1> to vector<1x239xi1>
    %155 = vector.broadcast %154 : vector<1x239xi1> to vector<4x239xi1>
    %156 = vector.broadcast %cst_107 : f32 to vector<4x239xf32>
    %157 = arith.select %155, %153, %156 : vector<4x239xi1>, vector<4x239xf32>
    %c0_108 = arith.constant 0 : index
    %c17_109 = arith.constant 17 : index
    %158 = vector.load %arg9[%c0_108, %c17_109] : memref<72x256xf32, #tpu.memory_space<vmem>>, vector<4x239xf32>
    tpu.vector_store %arg9[%c0_108, %c17_109], %157 {strides = array<i32>} : memref<72x256xf32, #tpu.memory_space<vmem>>, vector<4x239xf32>,
    %c0_110 = arith.constant 0 : index
    %c0_111 = arith.constant 0 : index
    %159 = vector.load %arg10[%c0_110, %c0_111] : memref<4x256xf32, #tpu.memory_space<vmem>>, vector<4x240xf32>
    %c8_112 = arith.constant 8 : index
    %c16_113 = arith.constant 16 : index
    %160 = vector.load %arg9[%c8_112, %c16_113] : memref<72x256xf32, #tpu.memory_space<vmem>>, vector<4x240xf32>
    tpu.vector_store %arg9[%c8_112, %c16_113], %159 {strides = array<i32>} : memref<72x256xf32, #tpu.memory_space<vmem>>, vector<4x240xf32>,
    %161 = vector.extract_strided_slice %16 {offsets = [0, 15], sizes = [1, 241], strides = [1, 1]} : vector<1x256xi32> to vector<1x241xi32>
    %c14_i32_114 = arith.constant 14 : i32
    %162 = vector.broadcast %c14_i32_114 : i32 to vector<1x241xi32>
    %163 = arith.cmpi sle, %161, %162 : vector<1x241xi32>
    %c0_115 = arith.constant 0 : index
    %c0_116 = arith.constant 0 : index
    %164 = vector.load %arg10[%c0_115, %c0_116] : memref<4x256xf32, #tpu.memory_space<vmem>>, vector<4x241xf32>
    %cst_117 = arith.constant 0.000000e+00 : f32
    %165 = vector.shape_cast %163 : vector<1x241xi1> to vector<1x241xi1>
    %166 = vector.broadcast %165 : vector<1x241xi1> to vector<4x241xi1>
    %167 = vector.broadcast %cst_117 : f32 to vector<4x241xf32>
    %168 = arith.select %166, %164, %167 : vector<4x241xi1>, vector<4x241xf32>
    %c16_118 = arith.constant 16 : index
    %c15_119 = arith.constant 15 : index
    %169 = vector.load %arg9[%c16_118, %c15_119] : memref<72x256xf32, #tpu.memory_space<vmem>>, vector<4x241xf32>
    tpu.vector_store %arg9[%c16_118, %c15_119], %168 {strides = array<i32>} : memref<72x256xf32, #tpu.memory_space<vmem>>, vector<4x241xf32>,
    %170 = vector.extract_strided_slice %16 {offsets = [0, 1], sizes = [1, 255], strides = [1, 1]} : vector<1x256xi32> to vector<1x255xi32>
    %c1_i32_120 = arith.constant 1 : i32
    %171 = vector.broadcast %c1_i32_120 : i32 to vector<1x255xi32>
    %172 = arith.cmpi sge, %170, %171 : vector<1x255xi32>
    %c0_121 = arith.constant 0 : index
    %c0_122 = arith.constant 0 : index
    %173 = vector.load %arg10[%c0_121, %c0_122] : memref<4x256xf32, #tpu.memory_space<vmem>>, vector<4x255xf32>
    %cst_123 = arith.constant 0.000000e+00 : f32
    %174 = vector.shape_cast %172 : vector<1x255xi1> to vector<1x255xi1>
    %175 = vector.broadcast %174 : vector<1x255xi1> to vector<4x255xi1>
    %176 = vector.broadcast %cst_123 : f32 to vector<4x255xf32>
    %177 = arith.select %175, %173, %176 : vector<4x255xi1>, vector<4x255xf32>
    %c24_124 = arith.constant 24 : index
    %c1_125 = arith.constant 1 : index
    %178 = vector.load %arg9[%c24_124, %c1_125] : memref<72x256xf32, #tpu.memory_space<vmem>>, vector<4x255xf32>
    tpu.vector_store %arg9[%c24_124, %c1_125], %177 {strides = array<i32>} : memref<72x256xf32, #tpu.memory_space<vmem>>, vector<4x255xf32>,
    %c0_126 = arith.constant 0 : index
    %c0_127 = arith.constant 0 : index
    %179 = vector.load %arg10[%c0_126, %c0_127] : memref<4x256xf32, #tpu.memory_space<vmem>>, vector<4x256xf32>
    %c32_128 = arith.constant 32 : index
    %c0_129 = arith.constant 0 : index
    %180 = vector.load %arg9[%c32_128, %c0_129] : memref<72x256xf32, #tpu.memory_space<vmem>>, vector<4x256xf32>
    tpu.vector_store %arg9[%c32_128, %c0_129], %179 {strides = array<i32>} : memref<72x256xf32, #tpu.memory_space<vmem>>, vector<4x256xf32>,
    %181 = vector.extract_strided_slice %16 {offsets = [0, 0], sizes = [1, 255], strides = [1, 1]} : vector<1x256xi32> to vector<1x255xi32>
    %c14_i32_130 = arith.constant 14 : i32
    %182 = vector.broadcast %c14_i32_130 : i32 to vector<1x255xi32>
    %183 = arith.cmpi sle, %181, %182 : vector<1x255xi32>
    %c0_131 = arith.constant 0 : index
    %c1_132 = arith.constant 1 : index
    %184 = vector.load %arg10[%c0_131, %c1_132] : memref<4x256xf32, #tpu.memory_space<vmem>>, vector<4x255xf32>
    %cst_133 = arith.constant 0.000000e+00 : f32
    %185 = vector.shape_cast %183 : vector<1x255xi1> to vector<1x255xi1>
    %186 = vector.broadcast %185 : vector<1x255xi1> to vector<4x255xi1>
    %187 = vector.broadcast %cst_133 : f32 to vector<4x255xf32>
    %188 = arith.select %186, %184, %187 : vector<4x255xi1>, vector<4x255xf32>
    %c40_134 = arith.constant 40 : index
    %c0_135 = arith.constant 0 : index
    %189 = vector.load %arg9[%c40_134, %c0_135] : memref<72x256xf32, #tpu.memory_space<vmem>>, vector<4x255xf32>
    tpu.vector_store %arg9[%c40_134, %c0_135], %188 {strides = array<i32>} : memref<72x256xf32, #tpu.memory_space<vmem>>, vector<4x255xf32>,
    %190 = vector.extract_strided_slice %16 {offsets = [0, 0], sizes = [1, 241], strides = [1, 1]} : vector<1x256xi32> to vector<1x241xi32>
    %c1_i32_136 = arith.constant 1 : i32
    %191 = vector.broadcast %c1_i32_136 : i32 to vector<1x241xi32>
    %192 = arith.cmpi sge, %190, %191 : vector<1x241xi32>
    %c0_137 = arith.constant 0 : index
    %c15_138 = arith.constant 15 : index
    %193 = vector.load %arg10[%c0_137, %c15_138] : memref<4x256xf32, #tpu.memory_space<vmem>>, vector<4x241xf32>
    %cst_139 = arith.constant 0.000000e+00 : f32
    %194 = vector.shape_cast %192 : vector<1x241xi1> to vector<1x241xi1>
    %195 = vector.broadcast %194 : vector<1x241xi1> to vector<4x241xi1>
    %196 = vector.broadcast %cst_139 : f32 to vector<4x241xf32>
    %197 = arith.select %195, %193, %196 : vector<4x241xi1>, vector<4x241xf32>
    %c48_140 = arith.constant 48 : index
    %c0_141 = arith.constant 0 : index
    %198 = vector.load %arg9[%c48_140, %c0_141] : memref<72x256xf32, #tpu.memory_space<vmem>>, vector<4x241xf32>
    tpu.vector_store %arg9[%c48_140, %c0_141], %197 {strides = array<i32>} : memref<72x256xf32, #tpu.memory_space<vmem>>, vector<4x241xf32>,
    %c0_142 = arith.constant 0 : index
    %c16_143 = arith.constant 16 : index
    %199 = vector.load %arg10[%c0_142, %c16_143] : memref<4x256xf32, #tpu.memory_space<vmem>>, vector<4x240xf32>
    %c56_144 = arith.constant 56 : index
    %c0_145 = arith.constant 0 : index
    %200 = vector.load %arg9[%c56_144, %c0_145] : memref<72x256xf32, #tpu.memory_space<vmem>>, vector<4x240xf32>
    tpu.vector_store %arg9[%c56_144, %c0_145], %199 {strides = array<i32>} : memref<72x256xf32, #tpu.memory_space<vmem>>, vector<4x240xf32>,
    %201 = vector.extract_strided_slice %16 {offsets = [0, 0], sizes = [1, 239], strides = [1, 1]} : vector<1x256xi32> to vector<1x239xi32>
    %c14_i32_146 = arith.constant 14 : i32
    %202 = vector.broadcast %c14_i32_146 : i32 to vector<1x239xi32>
    %203 = arith.cmpi sle, %201, %202 : vector<1x239xi32>
    %c0_147 = arith.constant 0 : index
    %c17_148 = arith.constant 17 : index
    %204 = vector.load %arg10[%c0_147, %c17_148] : memref<4x256xf32, #tpu.memory_space<vmem>>, vector<4x239xf32>
    %cst_149 = arith.constant 0.000000e+00 : f32
    %205 = vector.shape_cast %203 : vector<1x239xi1> to vector<1x239xi1>
    %206 = vector.broadcast %205 : vector<1x239xi1> to vector<4x239xi1>
    %207 = vector.broadcast %cst_149 : f32 to vector<4x239xf32>
    %208 = arith.select %206, %204, %207 : vector<4x239xi1>, vector<4x239xf32>
    %c64_150 = arith.constant 64 : index
    %c0_151 = arith.constant 0 : index
    %209 = vector.load %arg9[%c64_150, %c0_151] : memref<72x256xf32, #tpu.memory_space<vmem>>, vector<4x239xf32>
    tpu.vector_store %arg9[%c64_150, %c0_151], %208 {strides = array<i32>} : memref<72x256xf32, #tpu.memory_space<vmem>>, vector<4x239xf32>,
    %c0_152 = arith.constant 0 : index
    %c0_153 = arith.constant 0 : index
    %210 = vector.load %arg5[%c0_152, %c0_153] : memref<4x72xf32, #tpu.memory_space<vmem>>, vector<4x72xf32>
    %c0_154 = arith.constant 0 : index
    %c0_155 = arith.constant 0 : index
    %211 = vector.load %arg9[%c0_154, %c0_155] : memref<72x256xf32, #tpu.memory_space<vmem>>, vector<72x256xf32>
    %cst_156 = arith.constant dense<0.000000e+00> : vector<4x256xf32>
    %212 = tpu.matmul %210, %211, %cst_156 {dimension_numbers = #tpu.dot_dimension_numbers<[1], [0], [0], [1], [0, 0, 1, 1], [], []>} : vector<4x72xf32>, vector<72x256xf32>, vector<4x256xf32> -> vector<4x256xf32>
    %c0_157 = arith.constant 0 : index
    %c0_158 = arith.constant 0 : index
    %213 = vector.load %arg6[%c0_157, %c0_158] : memref<4x1xf32, #tpu.memory_space<vmem>>, vector<4x1xf32>
    %214 = vector.broadcast %213 : vector<4x1xf32> to vector<4x256xf32>
    %215 = arith.addf %212, %214 : vector<4x256xf32>
    %cst_159 = arith.constant 0.000000e+00 : f32
    %216 = vector.broadcast %cst_159 : f32 to vector<4x256xf32>
    %217 = arith.maximumf %215, %216 : vector<4x256xf32>
    %c0_160 = arith.constant 0 : index
    %c0_161 = arith.constant 0 : index
    %c0_162 = arith.constant 0 : index
    %218 = vector.load %arg7[%c0_160, %c0_161, %c0_162] : memref<1x4x256xf32, #tpu.memory_space<vmem>>, vector<1x4x256xf32>
    %219 = vector.shape_cast %218 : vector<1x4x256xf32> to vector<4x256xf32>
    %220 = vector.shape_cast %217 : vector<4x256xf32> to vector<1x4x256xf32>
    tpu.vector_store %arg7[%c0_160, %c0_161, %c0_162], %220 {strides = array<i32>} : memref<1x4x256xf32, #tpu.memory_space<vmem>>, vector<1x4x256xf32>,
    return
  }
  func.func @transform_0(%arg0: i32) -> (i32, i32, i32) {
    %c0_i32 = arith.constant 0 : i32
    %c0_i32_0 = arith.constant 0 : i32
    %c0_i32_1 = arith.constant 0 : i32
    return %arg0, %c0_i32, %c0_i32_0 : i32, i32, i32
  }
  func.func @transform_1(%arg0: i32) -> (i32, i32, i32) {
    %c0_i32 = arith.constant 0 : i32
    %c0_i32_0 = arith.constant 0 : i32
    %c0_i32_1 = arith.constant 0 : i32
    return %arg0, %c0_i32, %c0_i32_0 : i32, i32, i32
  }
  func.func @transform_2(%arg0: i32) -> (i32, i32) {
    %c0_i32 = arith.constant 0 : i32
    %c0_i32_0 = arith.constant 0 : i32
    %c0_i32_1 = arith.constant 0 : i32
    return %c0_i32, %c0_i32_0 : i32, i32
  }
  func.func @transform_3(%arg0: i32) -> (i32, i32) {
    %c0_i32 = arith.constant 0 : i32
    %c0_i32_0 = arith.constant 0 : i32
    %c0_i32_1 = arith.constant 0 : i32
    return %c0_i32, %c0_i32_0 : i32, i32
  }
  func.func @transform_4(%arg0: i32) -> (i32, i32) {
    %c0_i32 = arith.constant 0 : i32
    %c0_i32_0 = arith.constant 0 : i32
    %c0_i32_1 = arith.constant 0 : i32
    return %c0_i32, %c0_i32_0 : i32, i32
  }
  func.func @transform_5(%arg0: i32) -> (i32, i32) {
    %c0_i32 = arith.constant 0 : i32
    %c0_i32_0 = arith.constant 0 : i32
    %c0_i32_1 = arith.constant 0 : i32
    return %c0_i32, %c0_i32_0 : i32, i32
  }
  func.func @transform_6(%arg0: i32) -> (i32, i32, i32) {
    %c0_i32 = arith.constant 0 : i32
    %c0_i32_0 = arith.constant 0 : i32
    %c0_i32_1 = arith.constant 0 : i32
    return %arg0, %c0_i32, %c0_i32_0 : i32, i32, i32
  }
}

</mosaic_0001>

<llo_original>
// kernel: tpu_custom_call.1
$region0: #{tpu_custom_call.1}
  #allocation0 [shape = 'u32[]', space=smem, size = 0x4, offset = 0x4, fixed_abs, tag = 'smem constant byte address 0x4 - core index']
  #allocation1 [shape = 'u32[144,128]{1,0:T(1,128)}', space=vmem, size = 0x12000, scoped, tag = 'internal scratch']
  #allocation2 [shape = 'f32[72,256]{1,0:T(8,128)}', space=vmem, size = 0x12000, scoped, tag = 'scratch operand']
  #allocation3 [shape = 'f32[72,256]{1,0:T(8,128)}', space=vmem, size = 0x12000, scoped, tag = 'scratch operand']
  #allocation4 [shape = 'f32[4,256]{1,0:T(4,128)}', space=vmem, size = 0x1000, scoped, tag = 'scratch operand']
  %s0 = inlined_call_operand.hbm [shape: f32[2,4,256], index: 0, kind: input, shape index: {}]
  %s1 = inlined_call_operand.hbm [shape: f32[2,4,256], index: 1, kind: input, shape index: {}]
  %s2 = inlined_call_operand.vmem [shape: f32[4,72], index: 2, kind: input, shape index: {}]
  %s3 = inlined_call_operand.vmem [shape: f32[4,1], index: 3, kind: input, shape index: {}]
  %s4 = inlined_call_operand.vmem [shape: f32[4,72], index: 4, kind: input, shape index: {}]
  %s5 = inlined_call_operand.vmem [shape: f32[4,1], index: 5, kind: input, shape index: {}]
  %s6 = inlined_call_operand.hbm [shape: f32[2,4,256], index: 6, kind: output, shape index: {}]
  %s7 = sld [smem:[#allocation0]]
  $region65: #{tpu_custom_call.1} parent=0
    _
  %s9 = ssub.s32 1, %s7
  %s10 = scalar_select 0, %s9, %s7
  $region1: #{tpu_custom_call.1} parent=0
    #allocation5 [shape = 'u8[8192]{0}', space=vmem, size = 0x2000, scoped, tag = 'input window, operand 0']
    #allocation6 [shape = 's32[2]{0}', space=sflag, size = 0x8, scoped, tag = 'scoped memory for tpu_custom_call.1']
    #allocation7 [shape = 's32[2]{0}', space=sflag, size = 0x8, scoped, tag = 'scoped memory for tpu_custom_call.1']
    #allocation8 [shape = 'u8[8192]{0}', space=vmem, size = 0x2000, scoped, tag = 'input window, operand 1']
    #allocation9 [shape = 's32[2]{0}', space=sflag, size = 0x8, scoped, tag = 'scoped memory for tpu_custom_call.1']
    #allocation10 [shape = 'u8[8192]{0}', space=vmem, size = 0x2000, scoped, tag = 'output window, operand 0']
    %11 = vsyncpa [#allocation6], 0
    %s12 = scalar_lea.sflag [#allocation6], 1
    %13 = vsyncpa %s12, 0
    %14 = vsyncpa [#allocation9], 0
    %s15 = scalar_lea.sflag [#allocation9], 1
    %16 = vsyncpa %s15, 0
    %17 = vsyncpa [#allocation7], 0
    %s18 = scalar_lea.sflag [#allocation7], 1
    %19 = vsyncpa %s18, 0
    loop: start=0, step=1, limit=4
    $region2: #{tpu_custom_call.1} parent=1 // loop_pre_header
      _
    $region3: #{tpu_custom_call.1} parent=1 // loop_header
      %s21 = sphi 0, %s25
      %p22 = scmp.ge.s32.totalorder %s21, 4
      %s31 = sphi 0, %s33
      %s34 = sphi 0, %s31
      %s35 = sphi 0, %s34
      %s51 = sphi 0, %s35
      %s57 = sphi 0, %s59
      %s60 = sphi 0, %s57
      %s61 = sphi 0, %s60
      %s77 = sphi 0, %s61
      %s81 = sphi 0, %s81
      %s83 = sphi 0, %s81
      %s84 = sphi 0, %s83
      %s98 = sphi 0, %s84
      %s102 = sphi 0, %s102
      %s104 = sphi 0, %s102
      %s105 = sphi 0, %s104
      %s119 = sphi 0, %s105
      %s123 = sphi 0, %s123
      %s125 = sphi 0, %s123
      %s126 = sphi 0, %s125
      %s140 = sphi 0, %s126
      %s144 = sphi 0, %s144
      %s146 = sphi 0, %s144
      %s147 = sphi 0, %s146
      %s161 = sphi 0, %s147
      %s167 = sphi 0, %s169
      %s170 = sphi 0, %s167
      %s171 = sphi 0, %s170
      %s187 = sphi 0, %s171
    $region4: #{tpu_custom_call.1} parent=1 // loop_header_branch
      %24 = sbr.rel (%p22) target = $region8
    $region5: #{tpu_custom_call.1} parent=1 // loop_body
      %s26 = ssub.s32 %s21, 1
      %s27 = ssub.s32 %s21, 2
      %s28 = sadd.s32 %s21, 1
      %s29 = ssub.s32 %s21, %s28
      %p30 = scmp.eq.s32.totalorder %s29, 0
      %s32 = sadd.s32 %s31, 1
      %s33 = scalar_select %p30, %s31, %s32
      %p36 = pneg %p30
      %p37 = scmp.eq.s32.totalorder %s21, 1
      %p38 = por %p36, %p37
      %p39 = scmp.ne.s32.totalorder %s31, %s34
      %p40 = scmp.eq.s32.totalorder %s21, 0
      %p41 = por %p39, %p40
      %p42 = scmp.ne.s32.totalorder %s31, %s34
      %p43 = scmp.eq.s32.totalorder %s26, 1
      %p44 = por %p42, %p43
      %p45 = scmp.ne.s32.totalorder %s34, %s35
      %p46 = scmp.eq.s32.totalorder %s26, 0
      %p47 = por %p45, %p46
      %p48 = scmp.ne.s32.totalorder %s34, %s35
      %p49 = scmp.eq.s32.totalorder %s27, 1
      %p50 = por %p48, %p49
      %p52 = scmp.ne.s32.totalorder %s35, %s51
      %p53 = scmp.eq.s32.totalorder %s27, 0
      %p54 = por %p52, %p53
      %s55 = ssub.s32 %s21, %s28
      %p56 = scmp.eq.s32.totalorder %s55, 0
      %s58 = sadd.s32 %s57, 1
      %s59 = scalar_select %p56, %s57, %s58
      %p62 = pneg %p56
      %p63 = scmp.eq.s32.totalorder %s21, 1
      %p64 = por %p62, %p63
      %p65 = scmp.ne.s32.totalorder %s57, %s60
      %p66 = scmp.eq.s32.totalorder %s21, 0
      %p67 = por %p65, %p66
      %p68 = scmp.ne.s32.totalorder %s57, %s60
      %p69 = scmp.eq.s32.totalorder %s26, 1
      %p70 = por %p68, %p69
      %p71 = scmp.ne.s32.totalorder %s60, %s61
      %p72 = scmp.eq.s32.totalorder %s26, 0
      %p73 = por %p71, %p72
      %p74 = scmp.ne.s32.totalorder %s60, %s61
      %p75 = scmp.eq.s32.totalorder %s27, 1
      %p76 = por %p74, %p75
      %p78 = scmp.ne.s32.totalorder %s61, %s77
      %p79 = scmp.eq.s32.totalorder %s27, 0
      %p80 = por %p78, %p79
      %s82 = sadd.s32 %s81, 1
      %p85 = scmp.eq.s32.totalorder %s21, 1
      %p86 = scmp.ne.s32.totalorder %s81, %s83
      %p87 = scmp.eq.s32.totalorder %s21, 0
      %p88 = por %p86, %p87
      %p89 = scmp.ne.s32.totalorder %s81, %s83
      %p90 = scmp.eq.s32.totalorder %s26, 1
      %p91 = por %p89, %p90
      %p92 = scmp.ne.s32.totalorder %s83, %s84
      %p93 = scmp.eq.s32.totalorder %s26, 0
      %p94 = por %p92, %p93
      %p95 = scmp.ne.s32.totalorder %s83, %s84
      %p96 = scmp.eq.s32.totalorder %s27, 1
      %p97 = por %p95, %p96
      %p99 = scmp.ne.s32.totalorder %s84, %s98
      %p100 = scmp.eq.s32.totalorder %s27, 0
      %p101 = por %p99, %p100
      %s103 = sadd.s32 %s102, 1
      %p106 = scmp.eq.s32.totalorder %s21, 1
      %p107 = scmp.ne.s32.totalorder %s102, %s104
      %p108 = scmp.eq.s32.totalorder %s21, 0
      %p109 = por %p107, %p108
      %p110 = scmp.ne.s32.totalorder %s102, %s104
      %p111 = scmp.eq.s32.totalorder %s26, 1
      %p112 = por %p110, %p111
      %p113 = scmp.ne.s32.totalorder %s104, %s105
      %p114 = scmp.eq.s32.totalorder %s26, 0
      %p115 = por %p113, %p114
      %p116 = scmp.ne.s32.totalorder %s104, %s105
      %p117 = scmp.eq.s32.totalorder %s27, 1
      %p118 = por %p116, %p117
      %p120 = scmp.ne.s32.totalorder %s105, %s119
      %p121 = scmp.eq.s32.totalorder %s27, 0
      %p122 = por %p120, %p121
      %s124 = sadd.s32 %s123, 1
      %p127 = scmp.eq.s32.totalorder %s21, 1
      %p128 = scmp.ne.s32.totalorder %s123, %s125
      %p129 = scmp.eq.s32.totalorder %s21, 0
      %p130 = por %p128, %p129
      %p131 = scmp.ne.s32.totalorder %s123, %s125
      %p132 = scmp.eq.s32.totalorder %s26, 1
      %p133 = por %p131, %p132
      %p134 = scmp.ne.s32.totalorder %s125, %s126
      %p135 = scmp.eq.s32.totalorder %s26, 0
      %p136 = por %p134, %p135
      %p137 = scmp.ne.s32.totalorder %s125, %s126
      %p138 = scmp.eq.s32.totalorder %s27, 1
      %p139 = por %p137, %p138
      %p141 = scmp.ne.s32.totalorder %s126, %s140
      %p142 = scmp.eq.s32.totalorder %s27, 0
      %p143 = por %p141, %p142
      %s145 = sadd.s32 %s144, 1
      %p148 = scmp.eq.s32.totalorder %s21, 1
      %p149 = scmp.ne.s32.totalorder %s144, %s146
      %p150 = scmp.eq.s32.totalorder %s21, 0
      %p151 = por %p149, %p150
      %p152 = scmp.ne.s32.totalorder %s144, %s146
      %p153 = scmp.eq.s32.totalorder %s26, 1
      %p154 = por %p152, %p153
      %p155 = scmp.ne.s32.totalorder %s146, %s147
      %p156 = scmp.eq.s32.totalorder %s26, 0
      %p157 = por %p155, %p156
      %p158 = scmp.ne.s32.totalorder %s146, %s147
      %p159 = scmp.eq.s32.totalorder %s27, 1
      %p160 = por %p158, %p159
      %p162 = scmp.ne.s32.totalorder %s147, %s161
      %p163 = scmp.eq.s32.totalorder %s27, 0
      %p164 = por %p162, %p163
      %s165 = ssub.s32 %s21, %s28
      %p166 = scmp.eq.s32.totalorder %s165, 0
      %s168 = sadd.s32 %s167, 1
      %s169 = scalar_select %p166, %s167, %s168
      %p172 = pneg %p166
      %p173 = scmp.eq.s32.totalorder %s21, 1
      %p174 = por %p172, %p173
      %p175 = scmp.ne.s32.totalorder %s167, %s170
      %p176 = scmp.eq.s32.totalorder %s21, 0
      %p177 = por %p175, %p176
      %p178 = scmp.ne.s32.totalorder %s167, %s170
      %p179 = scmp.eq.s32.totalorder %s26, 1
      %p180 = por %p178, %p179
      %p181 = scmp.ne.s32.totalorder %s170, %s171
      %p182 = scmp.eq.s32.totalorder %s26, 0
      %p183 = por %p181, %p182
      %p184 = scmp.ne.s32.totalorder %s170, %s171
      %p185 = scmp.eq.s32.totalorder %s27, 1
      %p186 = por %p184, %p185
      %p188 = scmp.ne.s32.totalorder %s171, %s187
      %p189 = scmp.eq.s32.totalorder %s27, 0
      %p190 = por %p188, %p189
      %p191 = scmp.le.s32.totalorder 1, %s21
      %p192 = scmp.lt.s32.totalorder %s21, 3
      %p193 = pnand %p191, %p192
      %p194 = pneg %p193
      // Predicated region
      $region9: #{tpu_custom_call.1} parent=5 // pred_check
        _
      $region10: #{tpu_custom_call.1} parent=5 // pred_check_branch
        %196 = sbr.rel (%p193) target = $region12
      $region11: #{tpu_custom_call.1} parent=5 // pred_region
        %s197 = ssub.s32 %s21, 1
        // Predicated region
        $region13: #{tpu_custom_call.1} parent=11 // pred_check
          %p198 = pneg %p94
        $region14: #{tpu_custom_call.1} parent=11 // pred_check_branch
          %200 = sbr.rel (%p198) target = $region16
        $region15: #{tpu_custom_call.1} parent=11 // pred_region
          _
        $region16: #{tpu_custom_call.1} parent=11 // pred_fallthru
          _
        // Predicated region
        $region17: #{tpu_custom_call.1} parent=11 // pred_check
          %p201 = pneg %p115
        $region18: #{tpu_custom_call.1} parent=11 // pred_check_branch
          %203 = sbr.rel (%p201) target = $region20
        $region19: #{tpu_custom_call.1} parent=11 // pred_region
          _
        $region20: #{tpu_custom_call.1} parent=11 // pred_fallthru
          _
        // Predicated region
        $region21: #{tpu_custom_call.1} parent=11 // pred_check
          %p204 = pneg %p136
        $region22: #{tpu_custom_call.1} parent=11 // pred_check_branch
          %206 = sbr.rel (%p204) target = $region24
        $region23: #{tpu_custom_call.1} parent=11 // pred_region
          _
        $region24: #{tpu_custom_call.1} parent=11 // pred_fallthru
          _
        // Predicated region
        $region25: #{tpu_custom_call.1} parent=11 // pred_check
          %p207 = pneg %p157
        $region26: #{tpu_custom_call.1} parent=11 // pred_check_branch
          %209 = sbr.rel (%p207) target = $region28
        $region27: #{tpu_custom_call.1} parent=11 // pred_region
          _
        $region28: #{tpu_custom_call.1} parent=11 // pred_fallthru
          _
      $region12: #{tpu_custom_call.1} parent=5 // pred_fallthru
        _
      %p210 = scmp.lt.s32.totalorder %s21, 2
      // Predicated region
      $region29: #{tpu_custom_call.1} parent=5 // pred_check
        %p211 = pneg %p210
      $region30: #{tpu_custom_call.1} parent=5 // pred_check_branch
        %213 = sbr.rel (%p211) target = $region32
      $region31: #{tpu_custom_call.1} parent=5 // pred_region
        // Predicated region
        $region33: #{tpu_custom_call.1} parent=31 // pred_check
          %p214 = pneg %p41
        $region34: #{tpu_custom_call.1} parent=31 // pred_check_branch
          %216 = sbr.rel (%p214) target = $region36
        $region35: #{tpu_custom_call.1} parent=31 // pred_region
          %s217 = sand.u32 %s31, 1
          %s218 = scalar_lea.sflag [#allocation6], %s217
          %s219 = sand.u32 %s31, 1
          %s220 = smul.addr %s219, 8
          %s221 = scalar_lea.vmem [#allocation5], %s220
          %s223 = ssub.s32 128, 128
          %224 = vsyncadd %s218, %s223
          %s225 = smul.addr %s21, 2
          %s226 = smul.addr %s225, 64
          %s227 = scalar_lea.hbm %s0, %s226
          %s229 = sshll.u32 %s221, 4
          %s230 = int_to_ptr.vmem [resolvable:$true] %s229
          %232 = dma.hbm_to_vmem [thread:$0]  %s227, 128, %s230, %s218
        $region36: #{tpu_custom_call.1} parent=31 // pred_fallthru
          _
        // Predicated region
        $region37: #{tpu_custom_call.1} parent=31 // pred_check
          %p233 = pneg %p67
        $region38: #{tpu_custom_call.1} parent=31 // pred_check_branch
          %235 = sbr.rel (%p233) target = $region40
        $region39: #{tpu_custom_call.1} parent=31 // pred_region
          %s236 = sand.u32 %s57, 1
          %s237 = scalar_lea.sflag [#allocation9], %s236
          %s238 = sand.u32 %s57, 1
          %s239 = smul.addr %s238, 8
          %s240 = scalar_lea.vmem [#allocation8], %s239
          %s242 = ssub.s32 128, 128
          %243 = vsyncadd %s237, %s242
          %s244 = smul.addr %s21, 2
          %s245 = smul.addr %s244, 64
          %s246 = scalar_lea.hbm %s1, %s245
          %s248 = sshll.u32 %s240, 4
          %s249 = int_to_ptr.vmem [resolvable:$true] %s248
          %251 = dma.hbm_to_vmem [thread:$0]  %s246, 128, %s249, %s237
        $region40: #{tpu_custom_call.1} parent=31 // pred_fallthru
          _
      $region32: #{tpu_custom_call.1} parent=5 // pred_fallthru
        _
      %p252 = scmp.le.s32.totalorder 1, %s21
      %p253 = scmp.lt.s32.totalorder %s21, 3
      %p254 = pnand %p252, %p253
      %p255 = pneg %p254
      // Predicated region
      $region41: #{tpu_custom_call.1} parent=5 // pred_check
        _
      $region42: #{tpu_custom_call.1} parent=5 // pred_check_branch
        %257 = sbr.rel (%p254) target = $region44
      $region43: #{tpu_custom_call.1} parent=5 // pred_region
        %s258 = ssub.s32 %s21, 1
        %s259 = sand.u32 %s34, 1
        %s260 = scalar_lea.sflag [#allocation6], %s259
        %s261 = sand.u32 %s34, 1
        %s262 = smul.addr %s261, 8
        %s263 = scalar_lea.vmem [#allocation5], %s262
        // Predicated region
        $region45: #{tpu_custom_call.1} parent=43 // pred_check
          %p264 = pneg %p47
        $region46: #{tpu_custom_call.1} parent=43 // pred_check_branch
          %266 = sbr.rel (%p264) target = $region48
        $region47: #{tpu_custom_call.1} parent=43 // pred_region
          %267 = dma.done %s260, 128
        $region48: #{tpu_custom_call.1} parent=43 // pred_fallthru
          _
        %s268 = sand.u32 %s60, 1
        %s269 = scalar_lea.sflag [#allocation9], %s268
        %s270 = sand.u32 %s60, 1
        %s271 = smul.addr %s270, 8
        %s272 = scalar_lea.vmem [#allocation8], %s271
        // Predicated region
        $region49: #{tpu_custom_call.1} parent=43 // pred_check
          %p273 = pneg %p73
        $region50: #{tpu_custom_call.1} parent=43 // pred_check_branch
          %275 = sbr.rel (%p273) target = $region52
        $region51: #{tpu_custom_call.1} parent=43 // pred_region
          %276 = dma.done %s269, 128
        $region52: #{tpu_custom_call.1} parent=43 // pred_fallthru
          _
        %s277 = sand.u32 %s34, 1
        %s278 = scalar_lea.sflag [#allocation6], %s277
        %s279 = sand.u32 %s34, 1
        %s280 = smul.addr %s279, 8
        %s281 = scalar_lea.vmem [#allocation5], %s280
        %p282 = pneg %p47
        %p283 = pneg %p44
        %s284 = sand.u32 %s60, 1
        %s285 = scalar_lea.sflag [#allocation9], %s284
        %s286 = sand.u32 %s60, 1
        %s287 = smul.addr %s286, 8
        %s288 = scalar_lea.vmem [#allocation8], %s287
        %p289 = pneg %p73
        %p290 = pneg %p70
        %p291 = pneg %p94
        %p292 = pneg %p91
        %p293 = pneg %p115
        %p294 = pneg %p112
        %p295 = pneg %p136
        %p296 = pneg %p133
        %p297 = pneg %p157
        %p298 = pneg %p154
        %p299 = pneg %p183
        %p300 = pneg %p180
        %s301 = sand.u32 %s170, 1
        %s302 = scalar_lea.sflag [#allocation7], %s301
        %s303 = sand.u32 %s170, 1
        %s304 = smul.addr %s303, 8
        %s305 = scalar_lea.vmem [#allocation10], %s304
        %v306 = vlaneseq
        %v307 = vand.u32 %v306, 127
        %v308 = vadd.s32 %v307, 128
        %vm309 = vcmp.lt.s32.totalorder %v307, 0
        %v310 = vsub.s32 0, %v307
        %v311 = vsel %vm309, %v310, %v307
        %v312 = vshrl.u32 %v311, 4
        %v313 = vand.u32 %v311, 15
        %v314 = vsub.s32 0, %v313
        %v315 = vsel %vm309, %v314, %v313
        %vm316 = vcmp.lt.s32.totalorder %v308, 0
        %v317 = vsub.s32 0, %v308
        %v318 = vsel %vm316, %v317, %v308
        %v319 = vshrl.u32 %v318, 4
        %v320 = vand.u32 %v318, 15
        %v321 = vsub.s32 0, %v320
        %v322 = vsel %vm316, %v321, %v320
        %vm323 = vcmp.ne.s32.totalorder %v315, 0
        %vm324 = vcmp.ne.s32.totalorder %v322, 0
        %vm325 = vcmp.lt.s32.totalorder %v315, 0
        %vm326 = vcmp.lt.s32.totalorder %v322, 0
        %vm327 = vmand %vm325, %vm323
        %vm328 = vmand %vm326, %vm324
        %v329 = vadd.s32 %v315, 16
        %v330 = vadd.s32 %v322, 16
        %v331 = vsel %vm327, %v329, %v315
        %v332 = vsel %vm328, %v330, %v322
        %333 = vst [vmem:[#allocation2] sm:$0xff] 0.0
        %334 = vst [vmem:[#allocation2 + $0x8] sm:$0xff] 0.0
        %335 = vst [vmem:[#allocation2 + $0x10] sm:$0xff] 0.0
        %336 = vst [vmem:[#allocation2 + $0x18] sm:$0xff] 0.0
        %337 = vst [vmem:[#allocation2 + $0x20] sm:$0xff] 0.0
        %338 = vst [vmem:[#allocation2 + $0x28] sm:$0xff] 0.0
        %339 = vst [vmem:[#allocation2 + $0x30] sm:$0xff] 0.0
        %340 = vst [vmem:[#allocation2 + $0x38] sm:$0xff] 0.0
        %341 = vst [vmem:[#allocation2 + $0x40] sm:$0xff] 0.0
        %342 = vst [vmem:[#allocation2 + $0x48] sm:$0xff] 0.0
        %343 = vst [vmem:[#allocation2 + $0x50] sm:$0xff] 0.0
        %344 = vst [vmem:[#allocation2 + $0x58] sm:$0xff] 0.0
        %345 = vst [vmem:[#allocation2 + $0x60] sm:$0xff] 0.0
        %346 = vst [vmem:[#allocation2 + $0x68] sm:$0xff] 0.0
        %347 = vst [vmem:[#allocation2 + $0x70] sm:$0xff] 0.0
        %348 = vst [vmem:[#allocation2 + $0x78] sm:$0xff] 0.0
        %349 = vst [vmem:[#allocation2 + $0x80] sm:$0xff] 0.0
        %350 = vst [vmem:[#allocation2 + $0x88] sm:$0xff] 0.0
        %351 = vst [vmem:[#allocation3] sm:$0xff] 0.0
        %352 = vst [vmem:[#allocation3 + $0x8] sm:$0xff] 0.0
        %353 = vst [vmem:[#allocation3 + $0x10] sm:$0xff] 0.0
        %354 = vst [vmem:[#allocation3 + $0x18] sm:$0xff] 0.0
        %355 = vst [vmem:[#allocation3 + $0x20] sm:$0xff] 0.0
        %356 = vst [vmem:[#allocation3 + $0x28] sm:$0xff] 0.0
        %357 = vst [vmem:[#allocation3 + $0x30] sm:$0xff] 0.0
        %358 = vst [vmem:[#allocation3 + $0x38] sm:$0xff] 0.0
        %359 = vst [vmem:[#allocation3 + $0x40] sm:$0xff] 0.0
        %360 = vst [vmem:[#allocation3 + $0x48] sm:$0xff] 0.0
        %361 = vst [vmem:[#allocation3 + $0x50] sm:$0xff] 0.0
        %362 = vst [vmem:[#allocation3 + $0x58] sm:$0xff] 0.0
        %363 = vst [vmem:[#allocation3 + $0x60] sm:$0xff] 0.0
        %364 = vst [vmem:[#allocation3 + $0x68] sm:$0xff] 0.0
        %365 = vst [vmem:[#allocation3 + $0x70] sm:$0xff] 0.0
        %366 = vst [vmem:[#allocation3 + $0x78] sm:$0xff] 0.0
        %367 = vst [vmem:[#allocation3 + $0x80] sm:$0xff] 0.0
        %368 = vst [vmem:[#allocation3 + $0x88] sm:$0xff] 0.0
        %vm369 = vcmp.ge.s32.totalorder %v331, 1
        %vm370 = vcmp.ge.s32.totalorder %v332, 1
        %v371 = vld [vmem:[%s263] sm:$0xff]
        %v372 = vsel %vm369, 1, 0
        %v373 = vsel %vm370, 1, 0
        %vm374 = vcmp.eq.s32.totalorder %v372, 1
        %vm375 = vcmp.eq.s32.totalorder %v373, 1
        %v377 = vcombine.high %v371, %v371
        %378 = vrot.lane.b32.xlu0 %v371, 17
        %v379 = vpop.permute.xlu0 %378
        %380 = vrot.lane.b32.xlu0 %v377, 17
        %v381 = vpop.permute.xlu0 %380
        %vm382 = vcmask 138240
        %v383 = vsel %vm382, %v379, %v381
        %v386 = vsel %vm374, %v379, 0.0
        %v387 = vsel %vm375, %v383, 0.0
        %vm388 = vcmask 1043592
        %389 = vst.msk [vmem:[#allocation2] sm:$0xf] %vm388, %v386
        %390 = vst [vmem:[#allocation2 + $0x8] sm:$0xf] %v387
        %v391 = vld [vmem:[%s272] sm:$0xff]
        %v393 = vcombine.high %v391, %v391
        %394 = vrot.lane.b32.xlu0 %v391, 17
        %v395 = vpop.permute.xlu0 %394
        %396 = vrot.lane.b32.xlu0 %v393, 17
        %v397 = vpop.permute.xlu0 %396
        %v398 = vsel %vm382, %v395, %v397
        %v401 = vsel %vm374, %v395, 0.0
        %v402 = vsel %vm375, %v398, 0.0
        %v405 = vrot.slane %v401, 4
        %v406 = vrot.slane %v402, 4
        %vm409 = vcmask 1047692
        %410 = vst.msk [vmem:[#allocation2] sm:$0xf0] %vm409, %v405
        %411 = vst [vmem:[#allocation2 + $0x8] sm:$0xf0] %v406
        %v412 = vld [vmem:[%s263] sm:$0xff]
        %v414 = vcombine.high %v412, %v412
        %415 = vrot.lane.b32.xlu0 %v412, 16
        %v416 = vpop.permute.xlu0 %415
        %417 = vrot.lane.b32.xlu0 %v414, 16
        %v418 = vpop.permute.xlu0 %417
        %vm419 = vcmask 130048
        %v420 = vsel %vm419, %v416, %v418
        %vm423 = vcmask 1043584
        %424 = vst.msk [vmem:[#allocation2 + $0x10] sm:$0xf] %vm423, %v416
        %425 = vst [vmem:[#allocation2 + $0x18] sm:$0xf] %v420
        %v426 = vld [vmem:[%s272] sm:$0xff]
        %v428 = vcombine.low %v426, %v426
        %429 = vrot.lane.b32.xlu0 %v428, 16
        %v430 = vpop.permute.xlu0 %429
        %431 = vrot.lane.b32.xlu0 %v426, 16
        %v432 = vpop.permute.xlu0 %431
        %v433 = vsel %vm419, %v430, %v432
        %vm436 = vcmask 1047684
        %437 = vst.msk [vmem:[#allocation2 + $0x10] sm:$0xf0] %vm436, %v430
        %438 = vst [vmem:[#allocation2 + $0x18] sm:$0xf0] %v433
        %vm439 = vcmp.le.s32.totalorder %v331, 14
        %vm440 = vcmp.le.s32.totalorder %v332, 14
        %v441 = vld [vmem:[%s263] sm:$0xff]
        %v442 = vsel %vm439, 1, 0
        %v443 = vsel %vm440, 1, 0
        %vm444 = vcmp.eq.s32.totalorder %v442, 1
        %vm445 = vcmp.eq.s32.totalorder %v443, 1
        %v447 = vcombine.high %v441, %v441
        %448 = vrot.lane.b32.xlu0 %v441, 15
        %v449 = vpop.permute.xlu0 %448
        %450 = vrot.lane.b32.xlu0 %v447, 15
        %v451 = vpop.permute.xlu0 %450
        %vm452 = vcmask 121856
        %v453 = vsel %vm452, %v449, %v451
        %v456 = vsel %vm444, %v449, 0.0
        %v457 = vsel %vm445, %v453, 0.0
        %vm458 = vcmask 1043576
        %459 = vst.msk [vmem:[#allocation2 + $0x20] sm:$0xf] %vm458, %v456
        %460 = vst [vmem:[#allocation2 + $0x28] sm:$0xf] %v457
        %v461 = vld [vmem:[%s272] sm:$0xff]
        %v463 = vcombine.high %v461, %v461
        %464 = vrot.lane.b32.xlu0 %v461, 15
        %v465 = vpop.permute.xlu0 %464
        %466 = vrot.lane.b32.xlu0 %v463, 15
        %v467 = vpop.permute.xlu0 %466
        %v468 = vsel %vm452, %v465, %v467
        %v471 = vsel %vm444, %v465, 0.0
        %v472 = vsel %vm445, %v468, 0.0
        %v475 = vrot.slane %v471, 4
        %v476 = vrot.slane %v472, 4
        %vm479 = vcmask 1047676
        %480 = vst.msk [vmem:[#allocation2 + $0x20] sm:$0xf0] %vm479, %v475
        %481 = vst [vmem:[#allocation2 + $0x28] sm:$0xf0] %v476
        %v482 = vld [vmem:[%s263] sm:$0xff]
        %v484 = vcombine.high %v482, %v482
        %485 = vrot.lane.b32.xlu0 %v482, 1
        %v486 = vpop.permute.xlu0 %485
        %487 = vrot.lane.b32.xlu0 %v484, 1
        %v488 = vpop.permute.xlu0 %487
        %vm489 = vcmask 7168
        %v490 = vsel %vm489, %v486, %v488
        %v493 = vsel %vm374, %v486, 0.0
        %v494 = vsel %vm375, %v490, 0.0
        %vm495 = vcmask 1043464
        %496 = vst.msk [vmem:[#allocation2 + $0x30] sm:$0xf] %vm495, %v493
        %497 = vst [vmem:[#allocation2 + $0x38] sm:$0xf] %v494
        %v498 = vld [vmem:[%s272] sm:$0xff]
        %v500 = vcombine.high %v498, %v498
        %501 = vrot.lane.b32.xlu0 %v498, 1
        %v502 = vpop.permute.xlu0 %501
        %503 = vrot.lane.b32.xlu0 %v500, 1
        %v504 = vpop.permute.xlu0 %503
        %v505 = vsel %vm489, %v502, %v504
        %v508 = vsel %vm374, %v502, 0.0
        %v509 = vsel %vm375, %v505, 0.0
        %v512 = vrot.slane %v508, 4
        %v513 = vrot.slane %v509, 4
        %vm516 = vcmask 1047564
        %517 = vst.msk [vmem:[#allocation2 + $0x30] sm:$0xf0] %vm516, %v512
        %518 = vst [vmem:[#allocation2 + $0x38] sm:$0xf0] %v513
        %v519 = vld [vmem:[%s263] sm:$0xff]
        %v521 = vcombine.high %v519, %v519
        %523 = vst [vmem:[#allocation2 + $0x40] sm:$0xf] %v519
        %524 = vst [vmem:[#allocation2 + $0x48] sm:$0xf] %v521
        %v525 = vld [vmem:[%s272] sm:$0xff]
        %v527 = vcombine.low %v525, %v525
        %529 = vst [vmem:[#allocation2 + $0x40] sm:$0xf0] %v527
        %530 = vst [vmem:[#allocation2 + $0x48] sm:$0xf0] %v525
        %v531 = vld [vmem:[%s263] sm:$0xff]
        %v533 = vcombine.high %v531, %v531
        %534 = vrot.lane.b32.xlu0 %v531, 127
        %v535 = vpop.permute.xlu0 %534
        %536 = vrot.lane.b32.xlu0 %v533, 127
        %v537 = vpop.permute.xlu0 %536
        %vm538 = vcmask 1039360
        %v539 = vsel %vm538, %v535, %v537
        %v542 = vsel %vm444, %v539, 0.0
        %v543 = vsel %vm445, %v537, 0.0
        %544 = vst [vmem:[#allocation2 + $0x50] sm:$0xf] %v542
        %vm545 = vcmask 1035264
        %546 = vst.msk [vmem:[#allocation2 + $0x58] sm:$0xf] %vm545, %v543
        %v547 = vld [vmem:[%s272] sm:$0xff]
        %v549 = vcombine.high %v547, %v547
        %550 = vrot.lane.b32.xlu0 %v547, 127
        %v551 = vpop.permute.xlu0 %550
        %552 = vrot.lane.b32.xlu0 %v549, 127
        %v553 = vpop.permute.xlu0 %552
        %v554 = vsel %vm538, %v551, %v553
        %v557 = vsel %vm444, %v554, 0.0
        %v558 = vsel %vm445, %v553, 0.0
        %v561 = vrot.slane %v557, 4
        %v562 = vrot.slane %v558, 4
        %565 = vst [vmem:[#allocation2 + $0x50] sm:$0xf0] %v561
        %vm566 = vcmask 1039364
        %567 = vst.msk [vmem:[#allocation2 + $0x58] sm:$0xf0] %vm566, %v562
        %v568 = vld [vmem:[%s263] sm:$0xff]
        %v570 = vcombine.high %v568, %v568
        %571 = vrot.lane.b32.xlu0 %v568, 113
        %v572 = vpop.permute.xlu0 %571
        %573 = vrot.lane.b32.xlu0 %v570, 113
        %v574 = vpop.permute.xlu0 %573
        %vm575 = vcmask 924672
        %v576 = vsel %vm575, %v572, %v574
        %v579 = vsel %vm374, %v576, 0.0
        %v580 = vsel %vm375, %v574, 0.0
        %581 = vst [vmem:[#allocation2 + $0x60] sm:$0xf] %v579
        %vm582 = vcmask 920576
        %583 = vst.msk [vmem:[#allocation2 + $0x68] sm:$0xf] %vm582, %v580
        %v584 = vld [vmem:[%s272] sm:$0xff]
        %v586 = vcombine.high %v584, %v584
        %587 = vrot.lane.b32.xlu0 %v584, 113
        %v588 = vpop.permute.xlu0 %587
        %589 = vrot.lane.b32.xlu0 %v586, 113
        %v590 = vpop.permute.xlu0 %589
        %v591 = vsel %vm575, %v588, %v590
        %v594 = vsel %vm374, %v591, 0.0
        %v595 = vsel %vm375, %v590, 0.0
        %v598 = vrot.slane %v594, 4
        %v599 = vrot.slane %v595, 4
        %602 = vst [vmem:[#allocation2 + $0x60] sm:$0xf0] %v598
        %vm603 = vcmask 924676
        %604 = vst.msk [vmem:[#allocation2 + $0x68] sm:$0xf0] %vm603, %v599
        %v605 = vld [vmem:[%s263] sm:$0xff]
        %v607 = vcombine.high %v605, %v605
        %608 = vrot.lane.b32.xlu0 %v605, 112
        %v609 = vpop.permute.xlu0 %608
        %610 = vrot.lane.b32.xlu0 %v607, 112
        %v611 = vpop.permute.xlu0 %610
        %vm612 = vcmask 916480
        %v613 = vsel %vm612, %v609, %v611
        %616 = vst [vmem:[#allocation2 + $0x70] sm:$0xf] %v613
        %vm617 = vcmask 912384
        %618 = vst.msk [vmem:[#allocation2 + $0x78] sm:$0xf] %vm617, %v611
        %v619 = vld [vmem:[%s272] sm:$0xff]
        %v621 = vcombine.low %v619, %v619
        %622 = vrot.lane.b32.xlu0 %v621, 112
        %v623 = vpop.permute.xlu0 %622
        %624 = vrot.lane.b32.xlu0 %v619, 112
        %v625 = vpop.permute.xlu0 %624
        %v626 = vsel %vm612, %v623, %v625
        %629 = vst [vmem:[#allocation2 + $0x70] sm:$0xf0] %v626
        %vm630 = vcmask 916484
        %631 = vst.msk [vmem:[#allocation2 + $0x78] sm:$0xf0] %vm630, %v625
        %v632 = vld [vmem:[%s263] sm:$0xff]
        %v634 = vcombine.high %v632, %v632
        %635 = vrot.lane.b32.xlu0 %v632, 111
        %v636 = vpop.permute.xlu0 %635
        %637 = vrot.lane.b32.xlu0 %v634, 111
        %v638 = vpop.permute.xlu0 %637
        %vm639 = vcmask 908288
        %v640 = vsel %vm639, %v636, %v638
        %v643 = vsel %vm444, %v640, 0.0
        %v644 = vsel %vm445, %v638, 0.0
        %645 = vst [vmem:[#allocation2 + $0x80] sm:$0xf] %v643
        %vm646 = vcmask 904192
        %647 = vst.msk [vmem:[#allocation2 + $0x88] sm:$0xf] %vm646, %v644
        %v648 = vld [vmem:[%s272] sm:$0xff]
        %v650 = vcombine.high %v648, %v648
        %651 = vrot.lane.b32.xlu0 %v648, 111
        %v652 = vpop.permute.xlu0 %651
        %653 = vrot.lane.b32.xlu0 %v650, 111
        %v654 = vpop.permute.xlu0 %653
        %v655 = vsel %vm639, %v652, %v654
        %v658 = vsel %vm444, %v655, 0.0
        %v659 = vsel %vm445, %v654, 0.0
        %v662 = vrot.slane %v658, 4
        %v663 = vrot.slane %v659, 4
        %666 = vst [vmem:[#allocation2 + $0x80] sm:$0xf0] %v662
        %vm667 = vcmask 908292
        %668 = vst.msk [vmem:[#allocation2 + $0x88] sm:$0xf0] %vm667, %v663
        %v669 = vld [vmem:[%s2] sm:$0xf]
        %v670 = vld [vmem:[#allocation2] sm:$0xff]
        %v671 = vld [vmem:[#allocation2 + $0x8] sm:$0xff]
        %v672 = vld [vmem:[#allocation2 + $0x10] sm:$0xff]
        %v673 = vld [vmem:[#allocation2 + $0x18] sm:$0xff]
        %v674 = vld [vmem:[#allocation2 + $0x20] sm:$0xff]
        %v675 = vld [vmem:[#allocation2 + $0x28] sm:$0xff]
        %v676 = vld [vmem:[#allocation2 + $0x30] sm:$0xff]
        %v677 = vld [vmem:[#allocation2 + $0x38] sm:$0xff]
        %v678 = vld [vmem:[#allocation2 + $0x40] sm:$0xff]
        %v679 = vld [vmem:[#allocation2 + $0x48] sm:$0xff]
        %v680 = vld [vmem:[#allocation2 + $0x50] sm:$0xff]
        %v681 = vld [vmem:[#allocation2 + $0x58] sm:$0xff]
        %v682 = vld [vmem:[#allocation2 + $0x60] sm:$0xff]
        %v683 = vld [vmem:[#allocation2 + $0x68] sm:$0xff]
        %v684 = vld [vmem:[#allocation2 + $0x70] sm:$0xff]
        %v685 = vld [vmem:[#allocation2 + $0x78] sm:$0xff]
        %v686 = vld [vmem:[#allocation2 + $0x80] sm:$0xff]
        %v687 = vld [vmem:[#allocation2 + $0x88] sm:$0xff]
        %v688 = vld [vmem:[%s3] sm:$0xf]
        %690 = vset.pattern.permute.xlu0 0
        %691 = vperm.xlu0 %690, %v688
        %v692 = vpop.permute.xlu0 %691
        %vm694 = vcmask 588800
        %v696 = vsel %vm694, %v669, 0
        %698 = vmatprep.subr.mxu0 %v671
        %699 = vmatpush1.msra.mxu0 %v670
        %700 = vmatprep.subr.mxu0 %v673
        %701 = vmatpush1.msra.mxu0 %v672
        %702 = vmatprep.subr.mxu0 %v675
        %703 = vmatpush1.msra.mxu0 %v674
        %704 = vmatprep.subr.mxu0 %v677
        %705 = vmatpush1.msra.mxu0 %v676
        %706 = vmatprep.subr.mxu0 %v679
        %707 = vmatpush1.msra.mxu0 %v678
        %708 = vmatprep.subr.mxu0 %v681
        %709 = vmatpush1.msra.mxu0 %v680
        %710 = vmatprep.subr.mxu0 %v683
        %711 = vmatpush1.msra.mxu0 %v682
        %712 = vmatprep.subr.mxu0 %v685
        %713 = vmatpush1.msra.mxu0 %v684
        %714 = vmatprep.subr.mxu0 %v687
        %715 = vmatpush1.msra.mxu0 %v686
        %716 = vmatprep.subr.mxu0 0.0
        %717 = vmatpush1.msra.mxu0 0.0
        %718 = vmatprep.subr.mxu0 0.0
        %719 = vmatpush1.msra.mxu0 0.0
        %720 = vmatprep.subr.mxu0 0.0
        %721 = vmatpush1.msra.mxu0 0.0
        %722 = vmatprep.subr.mxu0 0.0
        %723 = vmatpush1.msra.mxu0 0.0
        %724 = vmatprep.subr.mxu0 0.0
        %725 = vmatpush1.msra.mxu0 0.0
        %726 = vmatprep.subr.mxu0 0.0
        %727 = vmatpush1.msra.mxu0 0.0
        %728 = vmatprep.subr.mxu0 0.0
        %729 = vmatpush1.msra.mxu0 0.0
        %730 = vmatprep.subr.mxu0 0.0
        %731 = vmatpush1.msra.mxu0 0.0
        %732 = vmatprep.subr.mxu0 0.0
        %733 = vmatpush1.msra.mxu0 0.0
        %734 = vmatprep.subr.mxu0 0.0
        %735 = vmatpush1.msra.mxu0 0.0
        %736 = vmatprep.subr.mxu0 0.0
        %737 = vmatpush1.msra.mxu0 0.0
        %738 = vmatprep.subr.mxu0 0.0
        %739 = vmatpush1.msra.mxu0 0.0
        %740 = vmatprep.subr.mxu0 0.0
        %741 = vmatpush1.msra.mxu0 0.0
        %742 = vmatprep.subr.mxu0 0.0
        %743 = vmatpush1.msra.mxu0 0.0
        %744 = vmatprep.subr.mxu0 0.0
        %745 = vmatpush1.msra.mxu0 0.0
        %746 = vmatprep.subr.mxu0 0.0
        %747 = vmatpush1.msra.mxu0 0.0
        %748 = vmatprep.subr.mxu0 0.0
        %749 = vmatpush1.msra.mxu0 0.0
        %750 = vmatprep.subr.mxu0 0.0
        %751 = vmatpush1.msra.mxu0 0.0
        %752 = vmatprep.subr.mxu0 0.0
        %753 = vmatpush1.msra.mxu0 0.0
        %754 = vmatprep.subr.mxu0 0.0
        %755 = vmatpush1.msra.mxu0 0.0
        %756 = vmatprep.subr.mxu0 0.0
        %757 = vmatpush1.msra.mxu0 0.0
        %758 = vmatprep.subr.mxu0 0.0
        %759 = vmatpush1.msra.mxu0 0.0
        %760 = vmatprep.subr.mxu0 0.0
        %761 = vmatpush1.msra.mxu0 0.0
        %762 = vmatprep.mubr.f32.mxu0 0.0
        %763 = vmatmul.mubr.f32.gmra.mrb[0].mxu0 %v696
        %v764 = vpop.f32.mrb[0].mxu0
        %v765 = vadd.f32 %v692, %v764
        %v766 = vpop.f32.mrb[0].mxu0
        %v767 = vadd.f32 %v692, %v766
        %768 = vdwg.mxu0
        %v769 = vmax.f32 %v765, 0.0
        %v770 = vmax.f32 %v767, 0.0
        %v773 = vcombine.low %v769, %v770
        %775 = vst [vmem:[#allocation4] sm:$0xff] %v773
        %v776 = vld [vmem:[#allocation4] sm:$0xff]
        %v778 = vcombine.high %v776, %v776
        %779 = vrot.lane.b32.xlu0 %v776, 17
        %v780 = vpop.permute.xlu0 %779
        %781 = vrot.lane.b32.xlu0 %v778, 17
        %v782 = vpop.permute.xlu0 %781
        %v783 = vsel %vm382, %v780, %v782
        %v786 = vsel %vm374, %v780, 0.0
        %v787 = vsel %vm375, %v783, 0.0
        %788 = vst.msk [vmem:[#allocation3] sm:$0xf] %vm388, %v786
        %789 = vst [vmem:[#allocation3 + $0x8] sm:$0xf] %v787
        %v790 = vld [vmem:[#allocation4] sm:$0xff]
        %v792 = vcombine.high %v790, %v790
        %793 = vrot.lane.b32.xlu0 %v790, 16
        %v794 = vpop.permute.xlu0 %793
        %795 = vrot.lane.b32.xlu0 %v792, 16
        %v796 = vpop.permute.xlu0 %795
        %v797 = vsel %vm419, %v794, %v796
        %800 = vst.msk [vmem:[#allocation3 + $0x10] sm:$0xf] %vm423, %v794
        %801 = vst [vmem:[#allocation3 + $0x18] sm:$0xf] %v797
        %v802 = vld [vmem:[#allocation4] sm:$0xff]
        %v804 = vcombine.high %v802, %v802
        %805 = vrot.lane.b32.xlu0 %v802, 15
        %v806 = vpop.permute.xlu0 %805
        %807 = vrot.lane.b32.xlu0 %v804, 15
        %v808 = vpop.permute.xlu0 %807
        %v809 = vsel %vm452, %v806, %v808
        %v812 = vsel %vm444, %v806, 0.0
        %v813 = vsel %vm445, %v809, 0.0
        %814 = vst.msk [vmem:[#allocation3 + $0x20] sm:$0xf] %vm458, %v812
        %815 = vst [vmem:[#allocation3 + $0x28] sm:$0xf] %v813
        %v816 = vld [vmem:[#allocation4] sm:$0xff]
        %v818 = vcombine.high %v816, %v816
        %819 = vrot.lane.b32.xlu0 %v816, 1
        %v820 = vpop.permute.xlu0 %819
        %821 = vrot.lane.b32.xlu0 %v818, 1
        %v822 = vpop.permute.xlu0 %821
        %v823 = vsel %vm489, %v820, %v822
        %v826 = vsel %vm374, %v820, 0.0
        %v827 = vsel %vm375, %v823, 0.0
        %828 = vst.msk [vmem:[#allocation3 + $0x30] sm:$0xf] %vm495, %v826
        %829 = vst [vmem:[#allocation3 + $0x38] sm:$0xf] %v827
        %v830 = vld [vmem:[#allocation4] sm:$0xff]
        %v832 = vcombine.high %v830, %v830
        %834 = vst [vmem:[#allocation3 + $0x40] sm:$0xf] %v830
        %835 = vst [vmem:[#allocation3 + $0x48] sm:$0xf] %v832
        %v836 = vld [vmem:[#allocation4] sm:$0xff]
        %v838 = vcombine.high %v836, %v836
        %839 = vrot.lane.b32.xlu0 %v836, 127
        %v840 = vpop.permute.xlu0 %839
        %841 = vrot.lane.b32.xlu0 %v838, 127
        %v842 = vpop.permute.xlu0 %841
        %v843 = vsel %vm538, %v840, %v842
        %v846 = vsel %vm444, %v843, 0.0
        %v847 = vsel %vm445, %v842, 0.0
        %848 = vst [vmem:[#allocation3 + $0x50] sm:$0xf] %v846
        %849 = vst.msk [vmem:[#allocation3 + $0x58] sm:$0xf] %vm545, %v847
        %v850 = vld [vmem:[#allocation4] sm:$0xff]
        %v852 = vcombine.high %v850, %v850
        %853 = vrot.lane.b32.xlu0 %v850, 113
        %v854 = vpop.permute.xlu0 %853
        %855 = vrot.lane.b32.xlu0 %v852, 113
        %v856 = vpop.permute.xlu0 %855
        %v857 = vsel %vm575, %v854, %v856
        %v860 = vsel %vm374, %v857, 0.0
        %v861 = vsel %vm375, %v856, 0.0
        %862 = vst [vmem:[#allocation3 + $0x60] sm:$0xf] %v860
        %863 = vst.msk [vmem:[#allocation3 + $0x68] sm:$0xf] %vm582, %v861
        %v864 = vld [vmem:[#allocation4] sm:$0xff]
        %v866 = vcombine.high %v864, %v864
        %867 = vrot.lane.b32.xlu0 %v864, 112
        %v868 = vpop.permute.xlu0 %867
        %869 = vrot.lane.b32.xlu0 %v866, 112
        %v870 = vpop.permute.xlu0 %869
        %v871 = vsel %vm612, %v868, %v870
        %874 = vst [vmem:[#allocation3 + $0x70] sm:$0xf] %v871
        %875 = vst.msk [vmem:[#allocation3 + $0x78] sm:$0xf] %vm617, %v870
        %v876 = vld [vmem:[#allocation4] sm:$0xff]
        %v878 = vcombine.high %v876, %v876
        %879 = vrot.lane.b32.xlu0 %v876, 111
        %v880 = vpop.permute.xlu0 %879
        %881 = vrot.lane.b32.xlu0 %v878, 111
        %v882 = vpop.permute.xlu0 %881
        %v883 = vsel %vm639, %v880, %v882
        %v886 = vsel %vm444, %v883, 0.0
        %v887 = vsel %vm445, %v882, 0.0
        %888 = vst [vmem:[#allocation3 + $0x80] sm:$0xf] %v886
        %889 = vst.msk [vmem:[#allocation3 + $0x88] sm:$0xf] %vm646, %v887
        %v890 = vld [vmem:[%s4] sm:$0xf]
        %v891 = vld [vmem:[#allocation3] sm:$0xff]
        %v892 = vld [vmem:[#allocation3 + $0x8] sm:$0xff]
        %v893 = vld [vmem:[#allocation3 + $0x10] sm:$0xff]
        %v894 = vld [vmem:[#allocation3 + $0x18] sm:$0xff]
        %v895 = vld [vmem:[#allocation3 + $0x20] sm:$0xff]
        %v896 = vld [vmem:[#allocation3 + $0x28] sm:$0xff]
        %v897 = vld [vmem:[#allocation3 + $0x30] sm:$0xff]
        %v898 = vld [vmem:[#allocation3 + $0x38] sm:$0xff]
        %v899 = vld [vmem:[#allocation3 + $0x40] sm:$0xff]
        %v900 = vld [vmem:[#allocation3 + $0x48] sm:$0xff]
        %v901 = vld [vmem:[#allocation3 + $0x50] sm:$0xff]
        %v902 = vld [vmem:[#allocation3 + $0x58] sm:$0xff]
        %v903 = vld [vmem:[#allocation3 + $0x60] sm:$0xff]
        %v904 = vld [vmem:[#allocation3 + $0x68] sm:$0xff]
        %v905 = vld [vmem:[#allocation3 + $0x70] sm:$0xff]
        %v906 = vld [vmem:[#allocation3 + $0x78] sm:$0xff]
        %v907 = vld [vmem:[#allocation3 + $0x80] sm:$0xff]
        %v908 = vld [vmem:[#allocation3 + $0x88] sm:$0xff]
        %v909 = vld [vmem:[%s5] sm:$0xf]
        %911 = vset.pattern.permute.xlu0 0
        %912 = vperm.xlu0 %911, %v909
        %v913 = vpop.permute.xlu0 %912
        %v916 = vsel %vm694, %v890, 0
        %918 = vmatprep.subr.mxu0 %v892
        %919 = vmatpush1.msra.mxu0 %v891
        %920 = vmatprep.subr.mxu0 %v894
        %921 = vmatpush1.msra.mxu0 %v893
        %922 = vmatprep.subr.mxu0 %v896
        %923 = vmatpush1.msra.mxu0 %v895
        %924 = vmatprep.subr.mxu0 %v898
        %925 = vmatpush1.msra.mxu0 %v897
        %926 = vmatprep.subr.mxu0 %v900
        %927 = vmatpush1.msra.mxu0 %v899
        %928 = vmatprep.subr.mxu0 %v902
        %929 = vmatpush1.msra.mxu0 %v901
        %930 = vmatprep.subr.mxu0 %v904
        %931 = vmatpush1.msra.mxu0 %v903
        %932 = vmatprep.subr.mxu0 %v906
        %933 = vmatpush1.msra.mxu0 %v905
        %934 = vmatprep.subr.mxu0 %v908
        %935 = vmatpush1.msra.mxu0 %v907
        %936 = vmatprep.subr.mxu0 0.0
        %937 = vmatpush1.msra.mxu0 0.0
        %938 = vmatprep.subr.mxu0 0.0
        %939 = vmatpush1.msra.mxu0 0.0
        %940 = vmatprep.subr.mxu0 0.0
        %941 = vmatpush1.msra.mxu0 0.0
        %942 = vmatprep.subr.mxu0 0.0
        %943 = vmatpush1.msra.mxu0 0.0
        %944 = vmatprep.subr.mxu0 0.0
        %945 = vmatpush1.msra.mxu0 0.0
        %946 = vmatprep.subr.mxu0 0.0
        %947 = vmatpush1.msra.mxu0 0.0
        %948 = vmatprep.subr.mxu0 0.0
        %949 = vmatpush1.msra.mxu0 0.0
        %950 = vmatprep.subr.mxu0 0.0
        %951 = vmatpush1.msra.mxu0 0.0
        %952 = vmatprep.subr.mxu0 0.0
        %953 = vmatpush1.msra.mxu0 0.0
        %954 = vmatprep.subr.mxu0 0.0
        %955 = vmatpush1.msra.mxu0 0.0
        %956 = vmatprep.subr.mxu0 0.0
        %957 = vmatpush1.msra.mxu0 0.0
        %958 = vmatprep.subr.mxu0 0.0
        %959 = vmatpush1.msra.mxu0 0.0
        %960 = vmatprep.subr.mxu0 0.0
        %961 = vmatpush1.msra.mxu0 0.0
        %962 = vmatprep.subr.mxu0 0.0
        %963 = vmatpush1.msra.mxu0 0.0
        %964 = vmatprep.subr.mxu0 0.0
        %965 = vmatpush1.msra.mxu0 0.0
        %966 = vmatprep.subr.mxu0 0.0
        %967 = vmatpush1.msra.mxu0 0.0
        %968 = vmatprep.subr.mxu0 0.0
        %969 = vmatpush1.msra.mxu0 0.0
        %970 = vmatprep.subr.mxu0 0.0
        %971 = vmatpush1.msra.mxu0 0.0
        %972 = vmatprep.subr.mxu0 0.0
        %973 = vmatpush1.msra.mxu0 0.0
        %974 = vmatprep.subr.mxu0 0.0
        %975 = vmatpush1.msra.mxu0 0.0
        %976 = vmatprep.subr.mxu0 0.0
        %977 = vmatpush1.msra.mxu0 0.0
        %978 = vmatprep.subr.mxu0 0.0
        %979 = vmatpush1.msra.mxu0 0.0
        %980 = vmatprep.subr.mxu0 0.0
        %981 = vmatpush1.msra.mxu0 0.0
        %982 = vmatprep.mubr.f32.mxu0 0.0
        %983 = vmatmul.mubr.f32.gmra.mrb[0].mxu0 %v916
        %v984 = vpop.f32.mrb[0].mxu0
        %v985 = vadd.f32 %v913, %v984
        %v986 = vpop.f32.mrb[0].mxu0
        %v987 = vadd.f32 %v913, %v986
        %988 = vdwg.mxu0
        %v989 = vmax.f32 %v985, 0.0
        %v990 = vmax.f32 %v987, 0.0
        %v993 = vcombine.low %v989, %v990
        %995 = vst [vmem:[%s305] sm:$0xff] %v993
        %s996 = sand.u32 %s170, 1
        %s997 = scalar_lea.sflag [#allocation7], %s996
        %s998 = sand.u32 %s170, 1
        %s999 = smul.addr %s998, 8
        %s1000 = scalar_lea.vmem [#allocation10], %s999
        // Predicated region
        $region53: #{tpu_custom_call.1} parent=43 // pred_check
          %p1001 = pneg %p180
        $region54: #{tpu_custom_call.1} parent=43 // pred_check_branch
          %1003 = sbr.rel (%p1001) target = $region56
        $region55: #{tpu_custom_call.1} parent=43 // pred_region
          %s1005 = ssub.s32 128, 128
          %1006 = vsyncadd %s997, %s1005
          %s1007 = smul.addr %s26, 2
          %s1008 = smul.addr %s1007, 64
          %s1009 = scalar_lea.hbm %s6, %s1008
          %s1011 = sshll.u32 %s1000, 4
          %s1012 = int_to_ptr.vmem [resolvable:$true] %s1011
          %1014 = dma.vmem_to_hbm [thread:$0]  %s1012, 128, %s1009, %s997
        $region56: #{tpu_custom_call.1} parent=43 // pred_fallthru
          _
      $region44: #{tpu_custom_call.1} parent=5 // pred_fallthru
        _
      %p1015 = scmp.le.s32.totalorder 2, %s21
      // Predicated region
      $region57: #{tpu_custom_call.1} parent=5 // pred_check
        %p1016 = pneg %p1015
      $region58: #{tpu_custom_call.1} parent=5 // pred_check_branch
        %1018 = sbr.rel (%p1016) target = $region60
      $region59: #{tpu_custom_call.1} parent=5 // pred_region
        %s1019 = ssub.s32 %s21, 2
        // Predicated region
        $region61: #{tpu_custom_call.1} parent=59 // pred_check
          %p1020 = pneg %p186
        $region62: #{tpu_custom_call.1} parent=59 // pred_check_branch
          %1022 = sbr.rel (%p1020) target = $region64
        $region63: #{tpu_custom_call.1} parent=59 // pred_region
          %s1023 = sand.u32 %s171, 1
          %s1024 = scalar_lea.sflag [#allocation7], %s1023
          %s1025 = sand.u32 %s171, 1
          %s1026 = smul.addr %s1025, 8
          %s1027 = scalar_lea.vmem [#allocation10], %s1026
          %1028 = dma.done %s1024, 128
        $region64: #{tpu_custom_call.1} parent=59 // pred_fallthru
          _
      $region60: #{tpu_custom_call.1} parent=5 // pred_fallthru
        _
    $region6: #{tpu_custom_call.1} parent=1 // loop_footer
      %s25 = sadd.s32 1, %s21
    $region7: #{tpu_custom_call.1} parent=1 // loop_footer_branch
      %20 = sbr.rel target = $region3
    $region8: #{tpu_custom_call.1} parent=1 // loop_exit
      _
    %1029 = vsyncpa [#allocation6], 1
    %s1030 = scalar_lea.sflag [#allocation6], 1
    %1031 = vsyncpa %s1030, 1
    %1032 = vsyncpa [#allocation9], 1
    %s1033 = scalar_lea.sflag [#allocation9], 1
    %1034 = vsyncpa %s1033, 1
    %1035 = vsyncpa [#allocation7], 1
    %s1036 = scalar_lea.sflag [#allocation7], 1
    %1037 = vsyncpa %s1036, 1

</llo_original>
